<compile_context>
chip_gen: v7x
topology: tpu7x:2x2x1
jax: 0.10.0
libtpu: 0.0.40
codegen_flags: <defaults>
</compile_context>

<pallas_src>
import functools
import math

import jax
import jax.numpy as jnp
from jax.experimental import pallas as pl
from jax.experimental.pallas import tpu as pltpu


# ---------------------------------------------------------------------------
# Activations (elementwise, applied to the f32 hidden chunk)
# ---------------------------------------------------------------------------
def _act_relu(h):
    return jnp.maximum(h, 0.0)


def _act_gelu(h):  # exact erf-based GELU (matches torch/neural_sp `gelu`)
    return 0.5 * h * (1.0 + jax.scipy.special.erf(h * (1.0 / math.sqrt(2.0))))


def _act_gelu_accurate(h):  # tanh approximation
    c = math.sqrt(2.0 / math.pi)
    return 0.5 * h * (1.0 + jnp.tanh(c * (h + 0.044715 * h * h * h)))


def _act_swish(h):
    return h * jax.nn.sigmoid(h)


_ACTIVATIONS = {
    "relu": _act_relu,
    "gelu": _act_gelu,
    "gelu_accurate": _act_gelu_accurate,
    "swish": _act_swish,
}


# ---------------------------------------------------------------------------
# Kernel
# ---------------------------------------------------------------------------
def _ffn_kernel(x_ref, w1_ref, b1_ref, w2_ref, b2_ref, o_ref, acc_ref, *, act_fn):
    """One (row-tile, d_ff-chunk) step of  y = act(x @ W1 + b1) @ W2 + b2."""
    k = pl.program_id(1)

    @pl.when(k == 0)
    def _init():
        acc_ref[...] = jnp.zeros_like(acc_ref)

    # First matmul chunk: [tm, d_model] @ [d_model, tkf] -> f32 [tm, tkf]
    h = jnp.dot(x_ref[...], w1_ref[...], preferred_element_type=jnp.float32)
    h = act_fn(h + b1_ref[...].astype(jnp.float32))

    # Second matmul chunk, accumulated into the resident f32 scratch:
    # [tm, tkf] @ [tkf, d_model] -> [tm, d_model]
    acc_ref[...] += jnp.dot(h.astype(w2_ref.dtype), w2_ref[...],
                            preferred_element_type=jnp.float32)

    @pl.when(k == pl.num_programs(1) - 1)
    def _finalize():
        o_ref[...] = (acc_ref[...] + b2_ref[...].astype(jnp.float32)
                      ).astype(o_ref.dtype)


def _round_up(x, m):
    return (x + m - 1) // m * m


def _pick_dff_tile(d_ff, tkf):
    """Largest multiple of 128 that is <= tkf and divides d_ff (else full d_ff)."""
    if d_ff <= tkf:
        return d_ff
    t = (min(tkf, d_ff) // 128) * 128
    while t >= 128:
        if d_ff % t == 0:
            return t
        t -= 128
    return d_ff


# ---------------------------------------------------------------------------
# Wrapper
# ---------------------------------------------------------------------------
@functools.partial(jax.jit, static_argnames=("activation", "tm", "tkf"))
def positionwise_feed_forward(xs, w1_t, b1, w2_t, b2, *,
                              activation="relu", tm=512, tkf=512):
    """Fused FFN:  y = act(xs @ w1_t + b1) @ w2_t + b2.

    xs:   [B, T, d_model]
    w1_t: [d_model, d_ff]  (= torch w_1.weight.T, pre-transposed once outside)
    b1:   [d_ff]
    w2_t: [d_ff, d_model]  (= torch w_2.weight.T, pre-transposed once outside)
    b2:   [d_model]
    Dropout is identity at inference time and is omitted.
    """
    act_fn = _ACTIVATIONS[activation]

    B, T, d_model = xs.shape
    d_ff = w1_t.shape[1]
    M = B * T

    # Row tile: as large as requested, never larger than (8-rounded) M, always
    # a multiple of 8 so the (8, 128) sublane constraint holds.
    tm_eff = _round_up(min(tm, _round_up(M, 8)), 8)
    M_pad = _round_up(M, tm_eff)

    # d_ff chunk: 128-aligned divisor of d_ff (or full d_ff if small/awkward).
    tkf_eff = _pick_dff_tile(d_ff, tkf)

    x2d = xs.reshape(M, d_model)
    if M_pad != M:
        x2d = jnp.pad(x2d, ((0, M_pad - M), (0, 0)))

    b1_2d = b1.reshape(1, d_ff)
    b2_2d = b2.reshape(1, d_model)

    grid = (M_pad // tm_eff, d_ff // tkf_eff)

    kernel = functools.partial(_ffn_kernel, act_fn=act_fn)

    out2d = pl.pallas_call(
        kernel,
        out_shape=jax.ShapeDtypeStruct((M_pad, d_model), xs.dtype),
        grid_spec=pltpu.PrefetchScalarGridSpec(
            num_scalar_prefetch=0,
            grid=grid,
            in_specs=[
                pl.BlockSpec((tm_eff, d_model), lambda i, k: (i, 0)),    # x rows
                pl.BlockSpec((d_model, tkf_eff), lambda i, k: (0, k)),   # W1^T chunk
                pl.BlockSpec((1, tkf_eff), lambda i, k: (0, k)),         # b1 chunk
                pl.BlockSpec((tkf_eff, d_model), lambda i, k: (k, 0)),   # W2^T chunk
                pl.BlockSpec((1, d_model), lambda i, k: (0, 0)),         # b2
            ],
            out_specs=pl.BlockSpec((tm_eff, d_model), lambda i, k: (i, 0)),
            scratch_shapes=[pltpu.VMEM((tm_eff, d_model), jnp.float32)],
        ),
        compiler_params=pltpu.CompilerParams(
            dimension_semantics=("parallel", "arbitrary")),
    )(x2d, w1_t, b1_2d, w2_t, b2_2d)

    return out2d[:M].reshape(B, T, d_model)


# ---------------------------------------------------------------------------
# Self-test
# ---------------------------------------------------------------------------
def _xavier_uniform(key, shape, dtype=jnp.float32):
    fan_out, fan_in = shape
    limit = (6.0 / (fan_in + fan_out)) ** 0.5
    return jax.random.uniform(key, shape, dtype, minval=-limit, maxval=limit)


if __name__ == "__main__":
    # Small shapes consistent with the module; M=320 is NOT a multiple of the
    # explicit tm=128 and d_ff=1024 gives 2 k-chunks at tkf=512, so both grid
    # axes have >1 step (exercises padding, row tiling, and the accumulator).
    B, T, d_model, d_ff = 2, 160, 128, 1024

    key = jax.random.PRNGKey(0)
    kx, k1, k2, kb1, kb2 = jax.random.split(key, 5)

    xs = jax.random.normal(kx, (B, T, d_model), dtype=jnp.float32)

    # PyTorch nn.Linear layout: weight [out, in], bias [out].
    w1 = _xavier_uniform(k1, (d_ff, d_model))                    # w_1.weight
    b1 = 0.1 * jax.random.normal(kb1, (d_ff,), jnp.float32)      # w_1.bias
    w2 = _xavier_uniform(k2, (d_model, d_ff))                    # w_2.weight
    b2 = 0.1 * jax.random.normal(kb2, (d_model,), jnp.float32)   # w_2.bias

    # One-time weight preparation OUTSIDE the jitted hot path: no per-call
    # HBM transpose is paid by the kernel invocation.
    w1_t = jax.block_until_ready(w1.T)   # [d_model, d_ff]
    w2_t = jax.block_until_ready(w2.T)   # [d_ff, d_model]

    out = positionwise_feed_forward(xs, w1_t, b1, w2_t, b2,
                                    activation="relu", tm=128, tkf=512)
    out = jax.block_until_ready(out)

    # Pure-JAX reference check (dropout = identity at inference).
    ref = jnp.maximum(xs @ w1.T + b1, 0.0) @ w2.T + b2
    assert out.shape == (B, T, d_model)
    assert jnp.allclose(out, ref, atol=1e-3, rtol=1e-3), \
        float(jnp.max(jnp.abs(out - ref)))

    # Also sanity-check an elementwise non-relu activation path (swish).
    out_sw = jax.block_until_ready(
        positionwise_feed_forward(xs, w1_t, b1, w2_t, b2,
                                  activation="swish", tm=128, tkf=512))
    h_ref = xs @ w1.T + b1
    ref_sw = (h_ref * jax.nn.sigmoid(h_ref)) @ w2.T + b2
    assert jnp.allclose(out_sw, ref_sw, atol=1e-3, rtol=1e-3), \
        float(jnp.max(jnp.abs(out_sw - ref_sw)))

    print("KERNEL_OK")
</pallas_src>

<mosaic_0001>
module attributes {stable_mosaic.version = 11 : i64} {
  func.func @_ffn_kernel(%arg0: i32, %arg1: i32, %arg2: memref<128x128xf32, #tpu.memory_space<vmem>>, %arg3: memref<128x512xf32, #tpu.memory_space<vmem>>, %arg4: memref<1x512xf32, #tpu.memory_space<vmem>>, %arg5: memref<512x128xf32, #tpu.memory_space<vmem>>, %arg6: memref<1x128xf32, #tpu.memory_space<vmem>>, %arg7: memref<128x128xf32, #tpu.memory_space<vmem>>, %arg8: memref<128x128xf32, #tpu.memory_space<vmem>>) attributes {dimension_semantics = [#tpu.dimension_semantics<parallel>, #tpu.dimension_semantics<arbitrary>], iteration_bounds = array<i64: 3, 2>, scalar_prefetch = 0 : i64, scratch_operands = 1 : i64, tpu.core_type = #tpu.core_type<tc>, window_params = [{transform_indices = @transform_0, window_bounds = array<i64: 128, 128>}, {transform_indices = @transform_1, window_bounds = array<i64: 128, 512>}, {transform_indices = @transform_2, window_bounds = array<i64: 1, 512>}, {transform_indices = @transform_3, window_bounds = array<i64: 512, 128>}, {pipeline_mode = #tpu.pipeline_mode<synchronous>, transform_indices = @transform_4, window_bounds = array<i64: 1, 128>}, {transform_indices = @transform_5, window_bounds = array<i64: 128, 128>}]} {
    %c0_i32 = arith.constant 0 : i32
    %0 = arith.cmpi eq, %arg1, %c0_i32 : i32
    %1 = arith.extui %0 : i1 to i32
    %c0_i32_0 = arith.constant 0 : i32
    %2 = arith.cmpi ne, %1, %c0_i32_0 : i32
    scf.if %2 {
      %cst_15 = arith.constant 0.000000e+00 : f32
      %19 = vector.broadcast %cst_15 : f32 to vector<128x128xf32>
      %c0_16 = arith.constant 0 : index
      %c0_17 = arith.constant 0 : index
      %20 = vector.load %arg8[%c0_16, %c0_17] : memref<128x128xf32, #tpu.memory_space<vmem>>, vector<128x128xf32>
      tpu.vector_store %arg8[%c0_16, %c0_17], %19 {strides = array<i32>} : memref<128x128xf32, #tpu.memory_space<vmem>>, vector<128x128xf32>,
    } else {
    }
    %c0 = arith.constant 0 : index
    %c0_1 = arith.constant 0 : index
    %3 = vector.load %arg2[%c0, %c0_1] : memref<128x128xf32, #tpu.memory_space<vmem>>, vector<128x128xf32>
    %c0_2 = arith.constant 0 : index
    %c0_3 = arith.constant 0 : index
    %4 = vector.load %arg3[%c0_2, %c0_3] : memref<128x512xf32, #tpu.memory_space<vmem>>, vector<128x512xf32>
    %cst = arith.constant dense<0.000000e+00> : vector<128x512xf32>
    %5 = tpu.matmul %3, %4, %cst {dimension_numbers = #tpu.dot_dimension_numbers<[1], [0], [0], [1], [0, 0, 1, 1], [], []>} : vector<128x128xf32>, vector<128x512xf32>, vector<128x512xf32> -> vector<128x512xf32>
    %c0_4 = arith.constant 0 : index
    %c0_5 = arith.constant 0 : index
    %6 = vector.load %arg4[%c0_4, %c0_5] : memref<1x512xf32, #tpu.memory_space<vmem>>, vector<1x512xf32>
    %7 = vector.broadcast %6 : vector<1x512xf32> to vector<128x512xf32>
    %8 = arith.addf %5, %7 : vector<128x512xf32>
    %cst_6 = arith.constant 0.000000e+00 : f32
    %9 = vector.broadcast %cst_6 : f32 to vector<128x512xf32>
    %10 = arith.maximumf %8, %9 : vector<128x512xf32>
    %c0_7 = arith.constant 0 : index
    %c0_8 = arith.constant 0 : index
    %11 = vector.load %arg8[%c0_7, %c0_8] : memref<128x128xf32, #tpu.memory_space<vmem>>, vector<128x128xf32>
    %c0_9 = arith.constant 0 : index
    %c0_10 = arith.constant 0 : index
    %12 = vector.load %arg5[%c0_9, %c0_10] : memref<512x128xf32, #tpu.memory_space<vmem>>, vector<512x128xf32>
    %cst_11 = arith.constant dense<0.000000e+00> : vector<128x128xf32>
    %13 = tpu.matmul %10, %12, %cst_11 {dimension_numbers = #tpu.dot_dimension_numbers<[1], [0], [0], [1], [0, 0, 1, 1], [], []>} : vector<128x512xf32>, vector<512x128xf32>, vector<128x128xf32> -> vector<128x128xf32>
    %14 = arith.addf %11, %13 : vector<128x128xf32>
    %c0_12 = arith.constant 0 : index
    %c0_13 = arith.constant 0 : index
    %15 = vector.load %arg8[%c0_12, %c0_13] : memref<128x128xf32, #tpu.memory_space<vmem>>, vector<128x128xf32>
    tpu.vector_store %arg8[%c0_12, %c0_13], %14 {strides = array<i32>} : memref<128x128xf32, #tpu.memory_space<vmem>>, vector<128x128xf32>,
    %c1_i32 = arith.constant 1 : i32
    %16 = arith.cmpi eq, %arg1, %c1_i32 : i32
    %17 = arith.extui %16 : i1 to i32
    %c0_i32_14 = arith.constant 0 : i32
    %18 = arith.cmpi ne, %17, %c0_i32_14 : i32
    scf.if %18 {
      %c0_15 = arith.constant 0 : index
      %c0_16 = arith.constant 0 : index
      %19 = vector.load %arg8[%c0_15, %c0_16] : memref<128x128xf32, #tpu.memory_space<vmem>>, vector<128x128xf32>
      %c0_17 = arith.constant 0 : index
      %c0_18 = arith.constant 0 : index
      %20 = vector.load %arg6[%c0_17, %c0_18] : memref<1x128xf32, #tpu.memory_space<vmem>>, vector<1x128xf32>
      %21 = vector.broadcast %20 : vector<1x128xf32> to vector<128x128xf32>
      %22 = arith.addf %19, %21 : vector<128x128xf32>
      %c0_19 = arith.constant 0 : index
      %c0_20 = arith.constant 0 : index
      %23 = vector.load %arg7[%c0_19, %c0_20] : memref<128x128xf32, #tpu.memory_space<vmem>>, vector<128x128xf32>
      tpu.vector_store %arg7[%c0_19, %c0_20], %22 {strides = array<i32>} : memref<128x128xf32, #tpu.memory_space<vmem>>, vector<128x128xf32>,
    } else {
    }
    return
  }
  func.func @transform_0(%arg0: i32, %arg1: i32) -> (i32, i32) {
    %c0_i32 = arith.constant 0 : i32
    %c0_i32_0 = arith.constant 0 : i32
    return %arg0, %c0_i32 : i32, i32
  }
  func.func @transform_1(%arg0: i32, %arg1: i32) -> (i32, i32) {
    %c0_i32 = arith.constant 0 : i32
    %c0_i32_0 = arith.constant 0 : i32
    return %c0_i32, %arg1 : i32, i32
  }
  func.func @transform_2(%arg0: i32, %arg1: i32) -> (i32, i32) {
    %c0_i32 = arith.constant 0 : i32
    %c0_i32_0 = arith.constant 0 : i32
    return %c0_i32, %arg1 : i32, i32
  }
  func.func @transform_3(%arg0: i32, %arg1: i32) -> (i32, i32) {
    %c0_i32 = arith.constant 0 : i32
    %c0_i32_0 = arith.constant 0 : i32
    return %arg1, %c0_i32 : i32, i32
  }
  func.func @transform_4(%arg0: i32, %arg1: i32) -> (i32, i32) {
    %c0_i32 = arith.constant 0 : i32
    %c0_i32_0 = arith.constant 0 : i32
    %c0_i32_1 = arith.constant 0 : i32
    return %c0_i32, %c0_i32_0 : i32, i32
  }
  func.func @transform_5(%arg0: i32, %arg1: i32) -> (i32, i32) {
    %c0_i32 = arith.constant 0 : i32
    %c0_i32_0 = arith.constant 0 : i32
    return %arg0, %c0_i32 : i32, i32
  }
}

</mosaic_0001>

<llo_original>
// kernel: positionwise_feed_forward.1
$region0: #{positionwise_feed_forward.1}
  #allocation0 [shape = 'u32[]', space=smem, size = 0x4, offset = 0x4, fixed_abs, tag = 'smem constant byte address 0x4 - core index']
  #allocation1 [shape = 'u32[144,128]{1,0:T(1,128)}', space=vmem, size = 0x12000, scoped, tag = 'internal scratch']
  #allocation2 [shape = 'f32[128,128]{1,0:T(8,128)}', space=vmem, size = 0x10000, scoped, tag = 'scratch operand']
  %s0 = inlined_call_operand.vmem [shape: f32[384,128], index: 0, kind: input, shape index: {}]
  %s1 = inlined_call_operand.hbm [shape: f32[128,1024], index: 1, kind: input, shape index: {}]
  %s2 = inlined_call_operand.vmem [shape: f32[1,1024], index: 2, kind: input, shape index: {}]
  %s3 = inlined_call_operand.hbm [shape: f32[1024,128], index: 3, kind: input, shape index: {}]
  %s4 = inlined_call_operand.vmem [shape: f32[1,128], index: 4, kind: input, shape index: {}]
  %s5 = inlined_call_operand.vmem [shape: f32[384,128], index: 5, kind: output, shape index: {}]
  %s6 = sld [smem:[#allocation0]]
  $region69: #{positionwise_feed_forward.1} parent=0
    _
  %s8 = ssub.s32 1, %s6
  %s9 = scalar_select 0, %s8, %s6
  $region1: #{positionwise_feed_forward.1} parent=0
    #allocation3 [shape = 'u8[524288]{0}', space=vmem, size = 0x80000, scoped, tag = 'input window, operand 1']
    #allocation4 [shape = 's32[2]{0}', space=sflag, size = 0x8, scoped, tag = 'scoped memory for positionwise_feed_forward.1']
    #allocation5 [shape = 'u8[524288]{0}', space=vmem, size = 0x80000, scoped, tag = 'input window, operand 3']
    #allocation6 [shape = 's32[2]{0}', space=sflag, size = 0x8, scoped, tag = 'scoped memory for positionwise_feed_forward.1']
    %10 = vsyncpa [#allocation4], 0
    %s11 = scalar_lea.sflag [#allocation4], 1
    %12 = vsyncpa %s11, 0
    %13 = vsyncpa [#allocation6], 0
    %s14 = scalar_lea.sflag [#allocation6], 1
    %15 = vsyncpa %s14, 0
    loop: start=0, step=1, limit=8
    $region2: #{positionwise_feed_forward.1} parent=1 // loop_pre_header
      _
    $region3: #{positionwise_feed_forward.1} parent=1 // loop_header
      %s17 = sphi 0, %s21
      %p18 = scmp.ge.s32.totalorder %s17, 8
      %s24 = sphi 0, %s36
      %s25 = sphi 0, %s32
      %s26 = sphi 0, %s24
      %s27 = sphi 0, %s25
      %s28 = sphi 0, %s26
      %s29 = sphi 0, %s27
      %s39 = sphi 0, %s41
      %s42 = sphi 0, %s39
      %s43 = sphi 0, %s42
      %s59 = sphi 0, %s43
      %s65 = sphi 0, %s67
      %s68 = sphi 0, %s65
      %s69 = sphi 0, %s68
      %s85 = sphi 0, %s69
      %s91 = sphi 0, %s93
      %s94 = sphi 0, %s91
      %s95 = sphi 0, %s94
      %s111 = sphi 0, %s95
      %s117 = sphi 0, %s119
      %s120 = sphi 0, %s117
      %s121 = sphi 0, %s120
      %s137 = sphi 0, %s121
      %s141 = sphi 0, %s141
      %s143 = sphi 0, %s141
      %s144 = sphi 0, %s143
      %s158 = sphi 0, %s144
      %s164 = sphi 0, %s166
      %s167 = sphi 0, %s164
      %s168 = sphi 0, %s167
      %s184 = sphi 0, %s168
    $region4: #{positionwise_feed_forward.1} parent=1 // loop_header_branch
      %20 = sbr.rel (%p18) target = $region8
    $region5: #{positionwise_feed_forward.1} parent=1 // loop_body
      %s22 = ssub.s32 %s17, 1
      %s23 = ssub.s32 %s17, 2
      %s30 = sadd.s32 1, %s25
      %p31 = scmp.ge.s32.totalorder %s30, 2
      %s32 = scalar_select %p31, 0, %s30
      %s33 = sadd.s32 1, %s24
      %s34 = scalar_select %p31, %s33, %s24
      %p35 = scmp.ge.s32.totalorder %s34, 3
      %s36 = scalar_select %p35, 0, %s34
      %s37 = ssub.s32 %s24, %s36
      %p38 = scmp.eq.s32.totalorder %s37, 0
      %s40 = sadd.s32 %s39, 1
      %s41 = scalar_select %p38, %s39, %s40
      %p44 = pneg %p38
      %p45 = scmp.eq.s32.totalorder %s17, 5
      %p46 = por %p44, %p45
      %p47 = scmp.ne.s32.totalorder %s39, %s42
      %p48 = scmp.eq.s32.totalorder %s17, 0
      %p49 = por %p47, %p48
      %p50 = scmp.ne.s32.totalorder %s39, %s42
      %p51 = scmp.eq.s32.totalorder %s22, 5
      %p52 = por %p50, %p51
      %p53 = scmp.ne.s32.totalorder %s42, %s43
      %p54 = scmp.eq.s32.totalorder %s22, 0
      %p55 = por %p53, %p54
      %p56 = scmp.ne.s32.totalorder %s42, %s43
      %p57 = scmp.eq.s32.totalorder %s23, 5
      %p58 = por %p56, %p57
      %p60 = scmp.ne.s32.totalorder %s43, %s59
      %p61 = scmp.eq.s32.totalorder %s23, 0
      %p62 = por %p60, %p61
      %s63 = ssub.s32 %s25, %s32
      %p64 = scmp.eq.s32.totalorder %s63, 0
      %s66 = sadd.s32 %s65, 1
      %s67 = scalar_select %p64, %s65, %s66
      %p70 = pneg %p64
      %p71 = scmp.eq.s32.totalorder %s17, 5
      %p72 = por %p70, %p71
      %p73 = scmp.ne.s32.totalorder %s65, %s68
      %p74 = scmp.eq.s32.totalorder %s17, 0
      %p75 = por %p73, %p74
      %p76 = scmp.ne.s32.totalorder %s65, %s68
      %p77 = scmp.eq.s32.totalorder %s22, 5
      %p78 = por %p76, %p77
      %p79 = scmp.ne.s32.totalorder %s68, %s69
      %p80 = scmp.eq.s32.totalorder %s22, 0
      %p81 = por %p79, %p80
      %p82 = scmp.ne.s32.totalorder %s68, %s69
      %p83 = scmp.eq.s32.totalorder %s23, 5
      %p84 = por %p82, %p83
      %p86 = scmp.ne.s32.totalorder %s69, %s85
      %p87 = scmp.eq.s32.totalorder %s23, 0
      %p88 = por %p86, %p87
      %s89 = ssub.s32 %s25, %s32
      %p90 = scmp.eq.s32.totalorder %s89, 0
      %s92 = sadd.s32 %s91, 1
      %s93 = scalar_select %p90, %s91, %s92
      %p96 = pneg %p90
      %p97 = scmp.eq.s32.totalorder %s17, 5
      %p98 = por %p96, %p97
      %p99 = scmp.ne.s32.totalorder %s91, %s94
      %p100 = scmp.eq.s32.totalorder %s17, 0
      %p101 = por %p99, %p100
      %p102 = scmp.ne.s32.totalorder %s91, %s94
      %p103 = scmp.eq.s32.totalorder %s22, 5
      %p104 = por %p102, %p103
      %p105 = scmp.ne.s32.totalorder %s94, %s95
      %p106 = scmp.eq.s32.totalorder %s22, 0
      %p107 = por %p105, %p106
      %p108 = scmp.ne.s32.totalorder %s94, %s95
      %p109 = scmp.eq.s32.totalorder %s23, 5
      %p110 = por %p108, %p109
      %p112 = scmp.ne.s32.totalorder %s95, %s111
      %p113 = scmp.eq.s32.totalorder %s23, 0
      %p114 = por %p112, %p113
      %s115 = ssub.s32 %s25, %s32
      %p116 = scmp.eq.s32.totalorder %s115, 0
      %s118 = sadd.s32 %s117, 1
      %s119 = scalar_select %p116, %s117, %s118
      %p122 = pneg %p116
      %p123 = scmp.eq.s32.totalorder %s17, 5
      %p124 = por %p122, %p123
      %p125 = scmp.ne.s32.totalorder %s117, %s120
      %p126 = scmp.eq.s32.totalorder %s17, 0
      %p127 = por %p125, %p126
      %p128 = scmp.ne.s32.totalorder %s117, %s120
      %p129 = scmp.eq.s32.totalorder %s22, 5
      %p130 = por %p128, %p129
      %p131 = scmp.ne.s32.totalorder %s120, %s121
      %p132 = scmp.eq.s32.totalorder %s22, 0
      %p133 = por %p131, %p132
      %p134 = scmp.ne.s32.totalorder %s120, %s121
      %p135 = scmp.eq.s32.totalorder %s23, 5
      %p136 = por %p134, %p135
      %p138 = scmp.ne.s32.totalorder %s121, %s137
      %p139 = scmp.eq.s32.totalorder %s23, 0
      %p140 = por %p138, %p139
      %s142 = sadd.s32 %s141, 1
      %p145 = scmp.eq.s32.totalorder %s17, 5
      %p146 = scmp.ne.s32.totalorder %s141, %s143
      %p147 = scmp.eq.s32.totalorder %s17, 0
      %p148 = por %p146, %p147
      %p149 = scmp.ne.s32.totalorder %s141, %s143
      %p150 = scmp.eq.s32.totalorder %s22, 5
      %p151 = por %p149, %p150
      %p152 = scmp.ne.s32.totalorder %s143, %s144
      %p153 = scmp.eq.s32.totalorder %s22, 0
      %p154 = por %p152, %p153
      %p155 = scmp.ne.s32.totalorder %s143, %s144
      %p156 = scmp.eq.s32.totalorder %s23, 5
      %p157 = por %p155, %p156
      %p159 = scmp.ne.s32.totalorder %s144, %s158
      %p160 = scmp.eq.s32.totalorder %s23, 0
      %p161 = por %p159, %p160
      %s162 = ssub.s32 %s24, %s36
      %p163 = scmp.eq.s32.totalorder %s162, 0
      %s165 = sadd.s32 %s164, 1
      %s166 = scalar_select %p163, %s164, %s165
      %p169 = pneg %p163
      %p170 = scmp.eq.s32.totalorder %s17, 5
      %p171 = por %p169, %p170
      %p172 = scmp.ne.s32.totalorder %s164, %s167
      %p173 = scmp.eq.s32.totalorder %s17, 0
      %p174 = por %p172, %p173
      %p175 = scmp.ne.s32.totalorder %s164, %s167
      %p176 = scmp.eq.s32.totalorder %s22, 5
      %p177 = por %p175, %p176
      %p178 = scmp.ne.s32.totalorder %s167, %s168
      %p179 = scmp.eq.s32.totalorder %s22, 0
      %p180 = por %p178, %p179
      %p181 = scmp.ne.s32.totalorder %s167, %s168
      %p182 = scmp.eq.s32.totalorder %s23, 5
      %p183 = por %p181, %p182
      %p185 = scmp.ne.s32.totalorder %s168, %s184
      %p186 = scmp.eq.s32.totalorder %s23, 0
      %p187 = por %p185, %p186
      %p188 = scmp.le.s32.totalorder 1, %s17
      %p189 = scmp.lt.s32.totalorder %s17, 7
      %p190 = pnand %p188, %p189
      %p191 = pneg %p190
      // Predicated region
      $region9: #{positionwise_feed_forward.1} parent=5 // pred_check
        _
      $region10: #{positionwise_feed_forward.1} parent=5 // pred_check_branch
        %193 = sbr.rel (%p190) target = $region12
      $region11: #{positionwise_feed_forward.1} parent=5 // pred_region
        %s194 = ssub.s32 %s17, 1
        // Predicated region
        $region13: #{positionwise_feed_forward.1} parent=11 // pred_check
          %p195 = pneg %p154
        $region14: #{positionwise_feed_forward.1} parent=11 // pred_check_branch
          %197 = sbr.rel (%p195) target = $region16
        $region15: #{positionwise_feed_forward.1} parent=11 // pred_region
          _
        $region16: #{positionwise_feed_forward.1} parent=11 // pred_fallthru
          _
      $region12: #{positionwise_feed_forward.1} parent=5 // pred_fallthru
        _
      %p198 = scmp.lt.s32.totalorder %s17, 6
      // Predicated region
      $region17: #{positionwise_feed_forward.1} parent=5 // pred_check
        %p199 = pneg %p198
      $region18: #{positionwise_feed_forward.1} parent=5 // pred_check_branch
        %201 = sbr.rel (%p199) target = $region20
      $region19: #{positionwise_feed_forward.1} parent=5 // pred_region
        // Predicated region
        $region21: #{positionwise_feed_forward.1} parent=19 // pred_check
          %p202 = pneg %p49
        $region22: #{positionwise_feed_forward.1} parent=19 // pred_check_branch
          %204 = sbr.rel (%p202) target = $region24
        $region23: #{positionwise_feed_forward.1} parent=19 // pred_region
          %s205 = smul.u32 16, %s24
          %p206 = scmp.lt.s32.totalorder %s205, 47
          %s207 = scalar_select %p206, %s205, 47
          %s208 = smul.addr %s207, 8
          %s209 = scalar_lea.vmem %s0, %s208
          %s210 = smul.u32 16, %s24
        $region24: #{positionwise_feed_forward.1} parent=19 // pred_fallthru
          _
        // Predicated region
        $region25: #{positionwise_feed_forward.1} parent=19 // pred_check
          %p211 = pneg %p75
        $region26: #{positionwise_feed_forward.1} parent=19 // pred_check_branch
          %213 = sbr.rel (%p211) target = $region28
        $region27: #{positionwise_feed_forward.1} parent=19 // pred_region
          %s214 = sand.u32 %s65, 1
          %s215 = scalar_lea.sflag [#allocation4], %s214
          %s216 = sand.u32 %s65, 1
          %s217 = smul.addr %s216, 512
          %s218 = scalar_lea.vmem [#allocation3], %s217
          %s219 = smul.u32 4, %s25
          %s221 = ssub.s32 8192, 8192
          %222 = vsyncadd %s215, %s221
          %s223 = smul.addr %s219, 128
          %s224 = scalar_lea.hbm %s1, %s223
          %s225 = sshll.u32 %s218, 4
          %s226 = int_to_ptr.vmem [resolvable:$true] %s225
          %231 = dma.hbm_to_vmem [thread:$0]  %s224, 8192, %s226, %s215, 1024, 512, 32
        $region28: #{positionwise_feed_forward.1} parent=19 // pred_fallthru
          _
        // Predicated region
        $region29: #{positionwise_feed_forward.1} parent=19 // pred_check
          %p232 = pneg %p101
        $region30: #{positionwise_feed_forward.1} parent=19 // pred_check_branch
          %234 = sbr.rel (%p232) target = $region32
        $region31: #{positionwise_feed_forward.1} parent=19 // pred_region
          %s235 = smul.u32 4, %s25
          %p236 = scmp.lt.s32.totalorder %s235, 7
          %s237 = scalar_select %p236, %s235, 7
          %s238 = scalar_lea.vmem %s2, %s237
          %s239 = smul.u32 4, %s25
        $region32: #{positionwise_feed_forward.1} parent=19 // pred_fallthru
          _
        // Predicated region
        $region33: #{positionwise_feed_forward.1} parent=19 // pred_check
          %p240 = pneg %p127
        $region34: #{positionwise_feed_forward.1} parent=19 // pred_check_branch
          %242 = sbr.rel (%p240) target = $region36
        $region35: #{positionwise_feed_forward.1} parent=19 // pred_region
          %s243 = sand.u32 %s117, 1
          %s244 = scalar_lea.sflag [#allocation6], %s243
          %s245 = sand.u32 %s117, 1
          %s246 = smul.addr %s245, 512
          %s247 = scalar_lea.vmem [#allocation5], %s246
          %s248 = smul.u32 64, %s25
          %s250 = ssub.s32 8192, 8192
          %251 = vsyncadd %s244, %s250
          %s252 = smul.addr %s248, 128
          %s253 = scalar_lea.hbm %s3, %s252
          %s254 = sshll.u32 %s247, 4
          %s255 = int_to_ptr.vmem [resolvable:$true] %s254
          %260 = dma.hbm_to_vmem [thread:$0]  %s253, 8192, %s255, %s244, 128, 128, 8
        $region36: #{positionwise_feed_forward.1} parent=19 // pred_fallthru
          _
      $region20: #{positionwise_feed_forward.1} parent=5 // pred_fallthru
        _
      %p261 = scmp.le.s32.totalorder 1, %s17
      %p262 = scmp.lt.s32.totalorder %s17, 7
      %p263 = pnand %p261, %p262
      %p264 = pneg %p263
      // Predicated region
      $region37: #{positionwise_feed_forward.1} parent=5 // pred_check
        _
      $region38: #{positionwise_feed_forward.1} parent=5 // pred_check_branch
        %266 = sbr.rel (%p263) target = $region40
      $region39: #{positionwise_feed_forward.1} parent=5 // pred_region
        %s267 = ssub.s32 %s17, 1
        %s268 = sand.u32 %s68, 1
        %s269 = scalar_lea.sflag [#allocation4], %s268
        %s270 = sand.u32 %s68, 1
        %s271 = smul.addr %s270, 512
        %s272 = scalar_lea.vmem [#allocation3], %s271
        // Predicated region
        $region41: #{positionwise_feed_forward.1} parent=39 // pred_check
          %p273 = pneg %p81
        $region42: #{positionwise_feed_forward.1} parent=39 // pred_check_branch
          %275 = sbr.rel (%p273) target = $region44
        $region43: #{positionwise_feed_forward.1} parent=39 // pred_region
          %276 = dma.done %s269, 8192
        $region44: #{positionwise_feed_forward.1} parent=39 // pred_fallthru
          _
        %s277 = sand.u32 %s120, 1
        %s278 = scalar_lea.sflag [#allocation6], %s277
        %s279 = sand.u32 %s120, 1
        %s280 = smul.addr %s279, 512
        %s281 = scalar_lea.vmem [#allocation5], %s280
        // Predicated region
        $region45: #{positionwise_feed_forward.1} parent=39 // pred_check
          %p282 = pneg %p133
        $region46: #{positionwise_feed_forward.1} parent=39 // pred_check_branch
          %284 = sbr.rel (%p282) target = $region48
        $region47: #{positionwise_feed_forward.1} parent=39 // pred_region
          %285 = dma.done %s278, 8192
        $region48: #{positionwise_feed_forward.1} parent=39 // pred_fallthru
          _
        %s286 = smul.u32 16, %s26
        %p287 = scmp.lt.s32.totalorder %s286, 47
        %s288 = scalar_select %p287, %s286, 47
        %s289 = smul.addr %s288, 8
        %s290 = scalar_lea.vmem %s0, %s289
        %p291 = pneg %p55
        %p292 = pneg %p52
        %s293 = sand.u32 %s68, 1
        %s294 = scalar_lea.sflag [#allocation4], %s293
        %s295 = sand.u32 %s68, 1
        %s296 = smul.addr %s295, 512
        %s297 = scalar_lea.vmem [#allocation3], %s296
        %p298 = pneg %p81
        %p299 = pneg %p78
        %s300 = smul.u32 4, %s27
        %p301 = scmp.lt.s32.totalorder %s300, 7
        %s302 = scalar_select %p301, %s300, 7
        %s303 = scalar_lea.vmem %s2, %s302
        %p304 = pneg %p107
        %p305 = pneg %p104
        %s306 = sand.u32 %s120, 1
        %s307 = scalar_lea.sflag [#allocation6], %s306
        %s308 = sand.u32 %s120, 1
        %s309 = smul.addr %s308, 512
        %s310 = scalar_lea.vmem [#allocation5], %s309
        %p311 = pneg %p133
        %p312 = pneg %p130
        %p313 = pneg %p154
        %p314 = pneg %p151
        %p315 = pneg %p180
        %p316 = pneg %p177
        %s317 = smul.u32 16, %s26
        %p318 = scmp.lt.s32.totalorder %s317, 47
        %s319 = scalar_select %p318, %s317, 47
        %s320 = smul.addr %s319, 8
        %s321 = scalar_lea.vmem %s5, %s320
        %s322 = smul.u32 16, %s26
        %p323 = scmp.lt.s32.totalorder %s322, 47
        %s324 = scalar_select %p323, %s322, 47
        %s325 = smul.addr %s324, 8
        %s326 = scalar_lea.vmem %s0, %s325
        %s327 = smul.u32 16, %s26
        %s328 = smul.u32 4, %s27
        %s329 = smul.u32 4, %s27
        %p330 = scmp.lt.s32.totalorder %s329, 7
        %s331 = scalar_select %p330, %s329, 7
        %s332 = scalar_lea.vmem %s2, %s331
        %s333 = smul.u32 4, %s27
        %s334 = smul.u32 64, %s27
        %s335 = smul.u32 16, %s26
        %p336 = scmp.lt.s32.totalorder %s335, 47
        %s337 = scalar_select %p336, %s335, 47
        %s338 = smul.addr %s337, 8
        %s339 = scalar_lea.vmem %s5, %s338
        %s340 = smul.u32 16, %s26
        %p341 = scmp.eq.s32.totalorder %s27, 0
        // Predicated region
        $region49: #{positionwise_feed_forward.1} parent=39 // pred_check
          %p342 = pneg %p341
        $region50: #{positionwise_feed_forward.1} parent=39 // pred_check_branch
          %344 = sbr.rel (%p342) target = $region52
        $region51: #{positionwise_feed_forward.1} parent=39 // pred_region
          %345 = vst [vmem:[#allocation2] sm:$0xff] 0.0
          %346 = vst [vmem:[#allocation2 + $0x8] sm:$0xff] 0.0
          %347 = vst [vmem:[#allocation2 + $0x10] sm:$0xff] 0.0
          %348 = vst [vmem:[#allocation2 + $0x18] sm:$0xff] 0.0
          %349 = vst [vmem:[#allocation2 + $0x20] sm:$0xff] 0.0
          %350 = vst [vmem:[#allocation2 + $0x28] sm:$0xff] 0.0
          %351 = vst [vmem:[#allocation2 + $0x30] sm:$0xff] 0.0
          %352 = vst [vmem:[#allocation2 + $0x38] sm:$0xff] 0.0
          %353 = vst [vmem:[#allocation2 + $0x40] sm:$0xff] 0.0
          %354 = vst [vmem:[#allocation2 + $0x48] sm:$0xff] 0.0
          %355 = vst [vmem:[#allocation2 + $0x50] sm:$0xff] 0.0
          %356 = vst [vmem:[#allocation2 + $0x58] sm:$0xff] 0.0
          %357 = vst [vmem:[#allocation2 + $0x60] sm:$0xff] 0.0
          %358 = vst [vmem:[#allocation2 + $0x68] sm:$0xff] 0.0
          %359 = vst [vmem:[#allocation2 + $0x70] sm:$0xff] 0.0
          %360 = vst [vmem:[#allocation2 + $0x78] sm:$0xff] 0.0
        $region52: #{positionwise_feed_forward.1} parent=39 // pred_fallthru
          _
        %v361 = vld [vmem:[%s326] sm:$0xff]
        %v362 = vld [vmem:[%s326 + $0x8] sm:$0xff]
        %v363 = vld [vmem:[%s326 + $0x10] sm:$0xff]
        %v364 = vld [vmem:[%s326 + $0x18] sm:$0xff]
        %v365 = vld [vmem:[%s326 + $0x20] sm:$0xff]
        %v366 = vld [vmem:[%s326 + $0x28] sm:$0xff]
        %v367 = vld [vmem:[%s326 + $0x30] sm:$0xff]
        %v368 = vld [vmem:[%s326 + $0x38] sm:$0xff]
        %v369 = vld [vmem:[%s326 + $0x40] sm:$0xff]
        %v370 = vld [vmem:[%s326 + $0x48] sm:$0xff]
        %v371 = vld [vmem:[%s326 + $0x50] sm:$0xff]
        %v372 = vld [vmem:[%s326 + $0x58] sm:$0xff]
        %v373 = vld [vmem:[%s326 + $0x60] sm:$0xff]
        %v374 = vld [vmem:[%s326 + $0x68] sm:$0xff]
        %v375 = vld [vmem:[%s326 + $0x70] sm:$0xff]
        %v376 = vld [vmem:[%s326 + $0x78] sm:$0xff]
        %v377 = vld [vmem:[%s272] sm:$0xff]
        %v378 = vld [vmem:[%s272 + $0x8] sm:$0xff]
        %v379 = vld [vmem:[%s272 + $0x10] sm:$0xff]
        %v380 = vld [vmem:[%s272 + $0x18] sm:$0xff]
        %v381 = vld [vmem:[%s272 + $0x20] sm:$0xff]
        %v382 = vld [vmem:[%s272 + $0x28] sm:$0xff]
        %v383 = vld [vmem:[%s272 + $0x30] sm:$0xff]
        %v384 = vld [vmem:[%s272 + $0x38] sm:$0xff]
        %v385 = vld [vmem:[%s272 + $0x40] sm:$0xff]
        %v386 = vld [vmem:[%s272 + $0x48] sm:$0xff]
        %v387 = vld [vmem:[%s272 + $0x50] sm:$0xff]
        %v388 = vld [vmem:[%s272 + $0x58] sm:$0xff]
        %v389 = vld [vmem:[%s272 + $0x60] sm:$0xff]
        %v390 = vld [vmem:[%s272 + $0x68] sm:$0xff]
        %v391 = vld [vmem:[%s272 + $0x70] sm:$0xff]
        %v392 = vld [vmem:[%s272 + $0x78] sm:$0xff]
        %v393 = vld [vmem:[%s272 + $0x80] sm:$0xff]
        %v394 = vld [vmem:[%s272 + $0x88] sm:$0xff]
        %v395 = vld [vmem:[%s272 + $0x90] sm:$0xff]
        %v396 = vld [vmem:[%s272 + $0x98] sm:$0xff]
        %v397 = vld [vmem:[%s272 + $0xa0] sm:$0xff]
        %v398 = vld [vmem:[%s272 + $0xa8] sm:$0xff]
        %v399 = vld [vmem:[%s272 + $0xb0] sm:$0xff]
        %v400 = vld [vmem:[%s272 + $0xb8] sm:$0xff]
        %v401 = vld [vmem:[%s272 + $0xc0] sm:$0xff]
        %v402 = vld [vmem:[%s272 + $0xc8] sm:$0xff]
        %v403 = vld [vmem:[%s272 + $0xd0] sm:$0xff]
        %v404 = vld [vmem:[%s272 + $0xd8] sm:$0xff]
        %v405 = vld [vmem:[%s272 + $0xe0] sm:$0xff]
        %v406 = vld [vmem:[%s272 + $0xe8] sm:$0xff]
        %v407 = vld [vmem:[%s272 + $0xf0] sm:$0xff]
        %v408 = vld [vmem:[%s272 + $0xf8] sm:$0xff]
        %v409 = vld [vmem:[%s272 + $0x100] sm:$0xff]
        %v410 = vld [vmem:[%s272 + $0x108] sm:$0xff]
        %v411 = vld [vmem:[%s272 + $0x110] sm:$0xff]
        %v412 = vld [vmem:[%s272 + $0x118] sm:$0xff]
        %v413 = vld [vmem:[%s272 + $0x120] sm:$0xff]
        %v414 = vld [vmem:[%s272 + $0x128] sm:$0xff]
        %v415 = vld [vmem:[%s272 + $0x130] sm:$0xff]
        %v416 = vld [vmem:[%s272 + $0x138] sm:$0xff]
        %v417 = vld [vmem:[%s272 + $0x140] sm:$0xff]
        %v418 = vld [vmem:[%s272 + $0x148] sm:$0xff]
        %v419 = vld [vmem:[%s272 + $0x150] sm:$0xff]
        %v420 = vld [vmem:[%s272 + $0x158] sm:$0xff]
        %v421 = vld [vmem:[%s272 + $0x160] sm:$0xff]
        %v422 = vld [vmem:[%s272 + $0x168] sm:$0xff]
        %v423 = vld [vmem:[%s272 + $0x170] sm:$0xff]
        %v424 = vld [vmem:[%s272 + $0x178] sm:$0xff]
        %v425 = vld [vmem:[%s272 + $0x180] sm:$0xff]
        %v426 = vld [vmem:[%s272 + $0x188] sm:$0xff]
        %v427 = vld [vmem:[%s272 + $0x190] sm:$0xff]
        %v428 = vld [vmem:[%s272 + $0x198] sm:$0xff]
        %v429 = vld [vmem:[%s272 + $0x1a0] sm:$0xff]
        %v430 = vld [vmem:[%s272 + $0x1a8] sm:$0xff]
        %v431 = vld [vmem:[%s272 + $0x1b0] sm:$0xff]
        %v432 = vld [vmem:[%s272 + $0x1b8] sm:$0xff]
        %v433 = vld [vmem:[%s272 + $0x1c0] sm:$0xff]
        %v434 = vld [vmem:[%s272 + $0x1c8] sm:$0xff]
        %v435 = vld [vmem:[%s272 + $0x1d0] sm:$0xff]
        %v436 = vld [vmem:[%s272 + $0x1d8] sm:$0xff]
        %v437 = vld [vmem:[%s272 + $0x1e0] sm:$0xff]
        %v438 = vld [vmem:[%s272 + $0x1e8] sm:$0xff]
        %v439 = vld [vmem:[%s272 + $0x1f0] sm:$0xff]
        %v440 = vld [vmem:[%s272 + $0x1f8] sm:$0xff]
        %v441 = vld [vmem:[%s332] sm:$0xf]
        %v443 = vlaneseq
        %v444 = vshrl.u32 %v443, 7
        %v445 = vsub.s32 0, %v444
        %v446 = vrot.slane %v441, %v445
        %v447 = vlaneseq
        %v448 = vshrl.u32 %v447, 7
        %v449 = vsub.s32 1, %v448
        %v450 = vrot.slane %v441, %v449
        %v451 = vlaneseq
        %v452 = vshrl.u32 %v451, 7
        %v453 = vsub.s32 2, %v452
        %v454 = vrot.slane %v441, %v453
        %v455 = vlaneseq
        %v456 = vshrl.u32 %v455, 7
        %v457 = vsub.s32 3, %v456
        %v458 = vrot.slane %v441, %v457
        %463 = vmatprep.subr.mxu0 %v378
        %464 = vmatpush1.msra.mxu0 %v377
        %465 = vmatprep.subr.mxu0 %v382
        %466 = vmatpush1.msra.mxu0 %v381
        %467 = vmatprep.subr.mxu0 %v386
        %468 = vmatpush1.msra.mxu0 %v385
        %469 = vmatprep.subr.mxu0 %v390
        %470 = vmatpush1.msra.mxu0 %v389
        %471 = vmatprep.subr.mxu0 %v394
        %472 = vmatpush1.msra.mxu0 %v393
        %473 = vmatprep.subr.mxu0 %v398
        %474 = vmatpush1.msra.mxu0 %v397
        %475 = vmatprep.subr.mxu0 %v402
        %476 = vmatpush1.msra.mxu0 %v401
        %477 = vmatprep.subr.mxu0 %v406
        %478 = vmatpush1.msra.mxu0 %v405
        %479 = vmatprep.subr.mxu0 %v410
        %480 = vmatpush1.msra.mxu0 %v409
        %481 = vmatprep.subr.mxu0 %v414
        %482 = vmatpush1.msra.mxu0 %v413
        %483 = vmatprep.subr.mxu0 %v418
        %484 = vmatpush1.msra.mxu0 %v417
        %485 = vmatprep.subr.mxu0 %v422
        %486 = vmatpush1.msra.mxu0 %v421
        %487 = vmatprep.subr.mxu0 %v426
        %488 = vmatpush1.msra.mxu0 %v425
        %489 = vmatprep.subr.mxu0 %v430
        %490 = vmatpush1.msra.mxu0 %v429
        %491 = vmatprep.subr.mxu0 %v434
        %492 = vmatpush1.msra.mxu0 %v433
        %493 = vmatprep.subr.mxu0 %v438
        %494 = vmatpush1.msra.mxu0 %v437
        %495 = vmatprep.subr.mxu0 0.0
        %496 = vmatpush1.msra.mxu0 0.0
        %497 = vmatprep.subr.mxu0 0.0
        %498 = vmatpush1.msra.mxu0 0.0
        %499 = vmatprep.subr.mxu0 0.0
        %500 = vmatpush1.msra.mxu0 0.0
        %501 = vmatprep.subr.mxu0 0.0
        %502 = vmatpush1.msra.mxu0 0.0
        %503 = vmatprep.subr.mxu0 0.0
        %504 = vmatpush1.msra.mxu0 0.0
        %505 = vmatprep.subr.mxu0 0.0
        %506 = vmatpush1.msra.mxu0 0.0
        %507 = vmatprep.subr.mxu0 0.0
        %508 = vmatpush1.msra.mxu0 0.0
        %509 = vmatprep.subr.mxu0 0.0
        %510 = vmatpush1.msra.mxu0 0.0
        %511 = vmatprep.subr.mxu0 0.0
        %512 = vmatpush1.msra.mxu0 0.0
        %513 = vmatprep.subr.mxu0 0.0
        %514 = vmatpush1.msra.mxu0 0.0
        %515 = vmatprep.subr.mxu0 0.0
        %516 = vmatpush1.msra.mxu0 0.0
        %517 = vmatprep.subr.mxu0 0.0
        %518 = vmatpush1.msra.mxu0 0.0
        %519 = vmatprep.subr.mxu0 0.0
        %520 = vmatpush1.msra.mxu0 0.0
        %521 = vmatprep.subr.mxu0 0.0
        %522 = vmatpush1.msra.mxu0 0.0
        %523 = vmatprep.subr.mxu0 0.0
        %524 = vmatpush1.msra.mxu0 0.0
        %525 = vmatprep.subr.mxu0 0.0
        %526 = vmatpush1.msra.mxu0 0.0
        %527 = vmatprep.mubr.f32.mxu0 0.0
        %528 = vmatmul.mubr.f32.gmra.mrb[0].mxu0 %v361
        %v529 = vpop.f32.mrb[0].mxu0
        %v530 = vadd.f32 %v446, %v529
        %v531 = vpop.f32.mrb[0].mxu0
        %v532 = vadd.f32 %v450, %v531
        %533 = vmatprep.mubr.f32.mxu0 0.0
        %534 = vmatmul.mubr.f32.gmra.mrb[0].mxu0 %v362
        %v535 = vpop.f32.mrb[0].mxu0
        %v536 = vadd.f32 %v446, %v535
        %v537 = vpop.f32.mrb[0].mxu0
        %v538 = vadd.f32 %v450, %v537
        %539 = vmatprep.mubr.f32.mxu0 0.0
        %540 = vmatmul.mubr.f32.gmra.mrb[0].mxu0 %v363
        %v541 = vpop.f32.mrb[0].mxu0
        %v542 = vadd.f32 %v446, %v541
        %v543 = vpop.f32.mrb[0].mxu0
        %v544 = vadd.f32 %v450, %v543
        %545 = vmatprep.mubr.f32.mxu0 0.0
        %546 = vmatmul.mubr.f32.gmra.mrb[0].mxu0 %v364
        %v547 = vpop.f32.mrb[0].mxu0
        %v548 = vadd.f32 %v446, %v547
        %v549 = vpop.f32.mrb[0].mxu0
        %v550 = vadd.f32 %v450, %v549
        %551 = vmatprep.mubr.f32.mxu0 0.0
        %552 = vmatmul.mubr.f32.gmra.mrb[0].mxu0 %v365
        %v553 = vpop.f32.mrb[0].mxu0
        %v554 = vadd.f32 %v446, %v553
        %v555 = vpop.f32.mrb[0].mxu0
        %v556 = vadd.f32 %v450, %v555
        %557 = vmatprep.mubr.f32.mxu0 0.0
        %558 = vmatmul.mubr.f32.gmra.mrb[0].mxu0 %v366
        %v559 = vpop.f32.mrb[0].mxu0
        %v560 = vadd.f32 %v446, %v559
        %v561 = vpop.f32.mrb[0].mxu0
        %v562 = vadd.f32 %v450, %v561
        %563 = vmatprep.mubr.f32.mxu0 0.0
        %564 = vmatmul.mubr.f32.gmra.mrb[0].mxu0 %v367
        %v565 = vpop.f32.mrb[0].mxu0
        %v566 = vadd.f32 %v446, %v565
        %v567 = vpop.f32.mrb[0].mxu0
        %v568 = vadd.f32 %v450, %v567
        %569 = vmatprep.mubr.f32.mxu0 0.0
        %570 = vmatmul.mubr.f32.gmra.mrb[0].mxu0 %v368
        %v571 = vpop.f32.mrb[0].mxu0
        %v572 = vadd.f32 %v446, %v571
        %v573 = vpop.f32.mrb[0].mxu0
        %v574 = vadd.f32 %v450, %v573
        %575 = vmatprep.mubr.f32.mxu0 0.0
        %576 = vmatmul.mubr.f32.gmra.mrb[0].mxu0 %v369
        %v577 = vpop.f32.mrb[0].mxu0
        %v578 = vadd.f32 %v446, %v577
        %v579 = vpop.f32.mrb[0].mxu0
        %v580 = vadd.f32 %v450, %v579
        %581 = vmatprep.mubr.f32.mxu0 0.0
        %582 = vmatmul.mubr.f32.gmra.mrb[0].mxu0 %v370
        %v583 = vpop.f32.mrb[0].mxu0
        %v584 = vadd.f32 %v446, %v583
        %v585 = vpop.f32.mrb[0].mxu0
        %v586 = vadd.f32 %v450, %v585
        %587 = vmatprep.mubr.f32.mxu0 0.0
        %588 = vmatmul.mubr.f32.gmra.mrb[0].mxu0 %v371
        %v589 = vpop.f32.mrb[0].mxu0
        %v590 = vadd.f32 %v446, %v589
        %v591 = vpop.f32.mrb[0].mxu0
        %v592 = vadd.f32 %v450, %v591
        %593 = vmatprep.mubr.f32.mxu0 0.0
        %594 = vmatmul.mubr.f32.gmra.mrb[0].mxu0 %v372
        %v595 = vpop.f32.mrb[0].mxu0
        %v596 = vadd.f32 %v446, %v595
        %v597 = vpop.f32.mrb[0].mxu0
        %v598 = vadd.f32 %v450, %v597
        %599 = vmatprep.mubr.f32.mxu0 0.0
        %600 = vmatmul.mubr.f32.gmra.mrb[0].mxu0 %v373
        %v601 = vpop.f32.mrb[0].mxu0
        %v602 = vadd.f32 %v446, %v601
        %v603 = vpop.f32.mrb[0].mxu0
        %v604 = vadd.f32 %v450, %v603
        %605 = vmatprep.mubr.f32.mxu0 0.0
        %606 = vmatmul.mubr.f32.gmra.mrb[0].mxu0 %v374
        %v607 = vpop.f32.mrb[0].mxu0
        %v608 = vadd.f32 %v446, %v607
        %v609 = vpop.f32.mrb[0].mxu0
        %v610 = vadd.f32 %v450, %v609
        %611 = vmatprep.mubr.f32.mxu0 0.0
        %612 = vmatmul.mubr.f32.gmra.mrb[0].mxu0 %v375
        %v613 = vpop.f32.mrb[0].mxu0
        %v614 = vadd.f32 %v446, %v613
        %v615 = vpop.f32.mrb[0].mxu0
        %v616 = vadd.f32 %v450, %v615
        %617 = vmatprep.mubr.f32.mxu0 0.0
        %618 = vmatmul.mubr.f32.gmra.mrb[0].mxu0 %v376
        %v619 = vpop.f32.mrb[0].mxu0
        %v620 = vadd.f32 %v446, %v619
        %v621 = vpop.f32.mrb[0].mxu0
        %v622 = vadd.f32 %v450, %v621
        %623 = vdwg.mxu0
        %624 = vmatprep.subr.mxu0 %v380
        %625 = vmatpush1.msra.mxu0 %v379
        %626 = vmatprep.subr.mxu0 %v384
        %627 = vmatpush1.msra.mxu0 %v383
        %628 = vmatprep.subr.mxu0 %v388
        %629 = vmatpush1.msra.mxu0 %v387
        %630 = vmatprep.subr.mxu0 %v392
        %631 = vmatpush1.msra.mxu0 %v391
        %632 = vmatprep.subr.mxu0 %v396
        %633 = vmatpush1.msra.mxu0 %v395
        %634 = vmatprep.subr.mxu0 %v400
        %635 = vmatpush1.msra.mxu0 %v399
        %636 = vmatprep.subr.mxu0 %v404
        %637 = vmatpush1.msra.mxu0 %v403
        %638 = vmatprep.subr.mxu0 %v408
        %639 = vmatpush1.msra.mxu0 %v407
        %640 = vmatprep.subr.mxu0 %v412
        %641 = vmatpush1.msra.mxu0 %v411
        %642 = vmatprep.subr.mxu0 %v416
        %643 = vmatpush1.msra.mxu0 %v415
        %644 = vmatprep.subr.mxu0 %v420
        %645 = vmatpush1.msra.mxu0 %v419
        %646 = vmatprep.subr.mxu0 %v424
        %647 = vmatpush1.msra.mxu0 %v423
        %648 = vmatprep.subr.mxu0 %v428
        %649 = vmatpush1.msra.mxu0 %v427
        %650 = vmatprep.subr.mxu0 %v432
        %651 = vmatpush1.msra.mxu0 %v431
        %652 = vmatprep.subr.mxu0 %v436
        %653 = vmatpush1.msra.mxu0 %v435
        %654 = vmatprep.subr.mxu0 %v440
        %655 = vmatpush1.msra.mxu0 %v439
        %656 = vmatprep.subr.mxu0 0.0
        %657 = vmatpush1.msra.mxu0 0.0
        %658 = vmatprep.subr.mxu0 0.0
        %659 = vmatpush1.msra.mxu0 0.0
        %660 = vmatprep.subr.mxu0 0.0
        %661 = vmatpush1.msra.mxu0 0.0
        %662 = vmatprep.subr.mxu0 0.0
        %663 = vmatpush1.msra.mxu0 0.0
        %664 = vmatprep.subr.mxu0 0.0
        %665 = vmatpush1.msra.mxu0 0.0
        %666 = vmatprep.subr.mxu0 0.0
        %667 = vmatpush1.msra.mxu0 0.0
        %668 = vmatprep.subr.mxu0 0.0
        %669 = vmatpush1.msra.mxu0 0.0
        %670 = vmatprep.subr.mxu0 0.0
        %671 = vmatpush1.msra.mxu0 0.0
        %672 = vmatprep.subr.mxu0 0.0
        %673 = vmatpush1.msra.mxu0 0.0
        %674 = vmatprep.subr.mxu0 0.0
        %675 = vmatpush1.msra.mxu0 0.0
        %676 = vmatprep.subr.mxu0 0.0
        %677 = vmatpush1.msra.mxu0 0.0
        %678 = vmatprep.subr.mxu0 0.0
        %679 = vmatpush1.msra.mxu0 0.0
        %680 = vmatprep.subr.mxu0 0.0
        %681 = vmatpush1.msra.mxu0 0.0
        %682 = vmatprep.subr.mxu0 0.0
        %683 = vmatpush1.msra.mxu0 0.0
        %684 = vmatprep.subr.mxu0 0.0
        %685 = vmatpush1.msra.mxu0 0.0
        %686 = vmatprep.subr.mxu0 0.0
        %687 = vmatpush1.msra.mxu0 0.0
        %688 = vmatprep.mubr.f32.mxu0 0.0
        %689 = vmatmul.mubr.f32.gmra.mrb[0].mxu0 %v361
        %v690 = vpop.f32.mrb[0].mxu0
        %v691 = vadd.f32 %v454, %v690
        %v692 = vpop.f32.mrb[0].mxu0
        %v693 = vadd.f32 %v458, %v692
        %694 = vmatprep.mubr.f32.mxu0 0.0
        %695 = vmatmul.mubr.f32.gmra.mrb[0].mxu0 %v362
        %v696 = vpop.f32.mrb[0].mxu0
        %v697 = vadd.f32 %v454, %v696
        %v698 = vpop.f32.mrb[0].mxu0
        %v699 = vadd.f32 %v458, %v698
        %700 = vmatprep.mubr.f32.mxu0 0.0
        %701 = vmatmul.mubr.f32.gmra.mrb[0].mxu0 %v363
        %v702 = vpop.f32.mrb[0].mxu0
        %v703 = vadd.f32 %v454, %v702
        %v704 = vpop.f32.mrb[0].mxu0
        %v705 = vadd.f32 %v458, %v704
        %706 = vmatprep.mubr.f32.mxu0 0.0
        %707 = vmatmul.mubr.f32.gmra.mrb[0].mxu0 %v364
        %v708 = vpop.f32.mrb[0].mxu0
        %v709 = vadd.f32 %v454, %v708
        %v710 = vpop.f32.mrb[0].mxu0
        %v711 = vadd.f32 %v458, %v710
        %712 = vmatprep.mubr.f32.mxu0 0.0
        %713 = vmatmul.mubr.f32.gmra.mrb[0].mxu0 %v365
        %v714 = vpop.f32.mrb[0].mxu0
        %v715 = vadd.f32 %v454, %v714
        %v716 = vpop.f32.mrb[0].mxu0
        %v717 = vadd.f32 %v458, %v716
        %718 = vmatprep.mubr.f32.mxu0 0.0
        %719 = vmatmul.mubr.f32.gmra.mrb[0].mxu0 %v366
        %v720 = vpop.f32.mrb[0].mxu0
        %v721 = vadd.f32 %v454, %v720
        %v722 = vpop.f32.mrb[0].mxu0
        %v723 = vadd.f32 %v458, %v722
        %724 = vmatprep.mubr.f32.mxu0 0.0
        %725 = vmatmul.mubr.f32.gmra.mrb[0].mxu0 %v367
        %v726 = vpop.f32.mrb[0].mxu0
        %v727 = vadd.f32 %v454, %v726
        %v728 = vpop.f32.mrb[0].mxu0
        %v729 = vadd.f32 %v458, %v728
        %730 = vmatprep.mubr.f32.mxu0 0.0
        %731 = vmatmul.mubr.f32.gmra.mrb[0].mxu0 %v368
        %v732 = vpop.f32.mrb[0].mxu0
        %v733 = vadd.f32 %v454, %v732
        %v734 = vpop.f32.mrb[0].mxu0
        %v735 = vadd.f32 %v458, %v734
        %736 = vmatprep.mubr.f32.mxu0 0.0
        %737 = vmatmul.mubr.f32.gmra.mrb[0].mxu0 %v369
        %v738 = vpop.f32.mrb[0].mxu0
        %v739 = vadd.f32 %v454, %v738
        %v740 = vpop.f32.mrb[0].mxu0
        %v741 = vadd.f32 %v458, %v740
        %742 = vmatprep.mubr.f32.mxu0 0.0
        %743 = vmatmul.mubr.f32.gmra.mrb[0].mxu0 %v370
        %v744 = vpop.f32.mrb[0].mxu0
        %v745 = vadd.f32 %v454, %v744
        %v746 = vpop.f32.mrb[0].mxu0
        %v747 = vadd.f32 %v458, %v746
        %748 = vmatprep.mubr.f32.mxu0 0.0
        %749 = vmatmul.mubr.f32.gmra.mrb[0].mxu0 %v371
        %v750 = vpop.f32.mrb[0].mxu0
        %v751 = vadd.f32 %v454, %v750
        %v752 = vpop.f32.mrb[0].mxu0
        %v753 = vadd.f32 %v458, %v752
        %754 = vmatprep.mubr.f32.mxu0 0.0
        %755 = vmatmul.mubr.f32.gmra.mrb[0].mxu0 %v372
        %v756 = vpop.f32.mrb[0].mxu0
        %v757 = vadd.f32 %v454, %v756
        %v758 = vpop.f32.mrb[0].mxu0
        %v759 = vadd.f32 %v458, %v758
        %760 = vmatprep.mubr.f32.mxu0 0.0
        %761 = vmatmul.mubr.f32.gmra.mrb[0].mxu0 %v373
        %v762 = vpop.f32.mrb[0].mxu0
        %v763 = vadd.f32 %v454, %v762
        %v764 = vpop.f32.mrb[0].mxu0
        %v765 = vadd.f32 %v458, %v764
        %766 = vmatprep.mubr.f32.mxu0 0.0
        %767 = vmatmul.mubr.f32.gmra.mrb[0].mxu0 %v374
        %v768 = vpop.f32.mrb[0].mxu0
        %v769 = vadd.f32 %v454, %v768
        %v770 = vpop.f32.mrb[0].mxu0
        %v771 = vadd.f32 %v458, %v770
        %772 = vmatprep.mubr.f32.mxu0 0.0
        %773 = vmatmul.mubr.f32.gmra.mrb[0].mxu0 %v375
        %v774 = vpop.f32.mrb[0].mxu0
        %v775 = vadd.f32 %v454, %v774
        %v776 = vpop.f32.mrb[0].mxu0
        %v777 = vadd.f32 %v458, %v776
        %778 = vmatprep.mubr.f32.mxu0 0.0
        %779 = vmatmul.mubr.f32.gmra.mrb[0].mxu0 %v376
        %v780 = vpop.f32.mrb[0].mxu0
        %v781 = vadd.f32 %v454, %v780
        %v782 = vpop.f32.mrb[0].mxu0
        %v783 = vadd.f32 %v458, %v782
        %784 = vdwg.mxu0
        %v785 = vmax.f32 %v530, 0.0
        %v786 = vmax.f32 %v532, 0.0
        %v787 = vmax.f32 %v691, 0.0
        %v788 = vmax.f32 %v693, 0.0
        %v789 = vmax.f32 %v536, 0.0
        %v790 = vmax.f32 %v538, 0.0
        %v791 = vmax.f32 %v697, 0.0
        %v792 = vmax.f32 %v699, 0.0
        %v793 = vmax.f32 %v542, 0.0
        %v794 = vmax.f32 %v544, 0.0
        %v795 = vmax.f32 %v703, 0.0
        %v796 = vmax.f32 %v705, 0.0
        %v797 = vmax.f32 %v548, 0.0
        %v798 = vmax.f32 %v550, 0.0
        %v799 = vmax.f32 %v709, 0.0
        %v800 = vmax.f32 %v711, 0.0
        %v801 = vmax.f32 %v554, 0.0
        %v802 = vmax.f32 %v556, 0.0
        %v803 = vmax.f32 %v715, 0.0
        %v804 = vmax.f32 %v717, 0.0
        %v805 = vmax.f32 %v560, 0.0
        %v806 = vmax.f32 %v562, 0.0
        %v807 = vmax.f32 %v721, 0.0
        %v808 = vmax.f32 %v723, 0.0
        %v809 = vmax.f32 %v566, 0.0
        %v810 = vmax.f32 %v568, 0.0
        %v811 = vmax.f32 %v727, 0.0
        %v812 = vmax.f32 %v729, 0.0
        %v813 = vmax.f32 %v572, 0.0
        %v814 = vmax.f32 %v574, 0.0
        %v815 = vmax.f32 %v733, 0.0
        %v816 = vmax.f32 %v735, 0.0
        %v817 = vmax.f32 %v578, 0.0
        %v818 = vmax.f32 %v580, 0.0
        %v819 = vmax.f32 %v739, 0.0
        %v820 = vmax.f32 %v741, 0.0
        %v821 = vmax.f32 %v584, 0.0
        %v822 = vmax.f32 %v586, 0.0
        %v823 = vmax.f32 %v745, 0.0
        %v824 = vmax.f32 %v747, 0.0
        %v825 = vmax.f32 %v590, 0.0
        %v826 = vmax.f32 %v592, 0.0
        %v827 = vmax.f32 %v751, 0.0
        %v828 = vmax.f32 %v753, 0.0
        %v829 = vmax.f32 %v596, 0.0
        %v830 = vmax.f32 %v598, 0.0
        %v831 = vmax.f32 %v757, 0.0
        %v832 = vmax.f32 %v759, 0.0
        %v833 = vmax.f32 %v602, 0.0
        %v834 = vmax.f32 %v604, 0.0
        %v835 = vmax.f32 %v763, 0.0
        %v836 = vmax.f32 %v765, 0.0
        %v837 = vmax.f32 %v608, 0.0
        %v838 = vmax.f32 %v610, 0.0
        %v839 = vmax.f32 %v769, 0.0
        %v840 = vmax.f32 %v771, 0.0
        %v841 = vmax.f32 %v614, 0.0
        %v842 = vmax.f32 %v616, 0.0
        %v843 = vmax.f32 %v775, 0.0
        %v844 = vmax.f32 %v777, 0.0
        %v845 = vmax.f32 %v620, 0.0
        %v846 = vmax.f32 %v622, 0.0
        %v847 = vmax.f32 %v781, 0.0
        %v848 = vmax.f32 %v783, 0.0
        %v849 = vld [vmem:[#allocation2] sm:$0xff]
        %v850 = vld [vmem:[#allocation2 + $0x8] sm:$0xff]
        %v851 = vld [vmem:[#allocation2 + $0x10] sm:$0xff]
        %v852 = vld [vmem:[#allocation2 + $0x18] sm:$0xff]
        %v853 = vld [vmem:[#allocation2 + $0x20] sm:$0xff]
        %v854 = vld [vmem:[#allocation2 + $0x28] sm:$0xff]
        %v855 = vld [vmem:[#allocation2 + $0x30] sm:$0xff]
        %v856 = vld [vmem:[#allocation2 + $0x38] sm:$0xff]
        %v857 = vld [vmem:[#allocation2 + $0x40] sm:$0xff]
        %v858 = vld [vmem:[#allocation2 + $0x48] sm:$0xff]
        %v859 = vld [vmem:[#allocation2 + $0x50] sm:$0xff]
        %v860 = vld [vmem:[#allocation2 + $0x58] sm:$0xff]
        %v861 = vld [vmem:[#allocation2 + $0x60] sm:$0xff]
        %v862 = vld [vmem:[#allocation2 + $0x68] sm:$0xff]
        %v863 = vld [vmem:[#allocation2 + $0x70] sm:$0xff]
        %v864 = vld [vmem:[#allocation2 + $0x78] sm:$0xff]
        %v865 = vld [vmem:[%s281] sm:$0xff]
        %v866 = vld [vmem:[%s281 + $0x8] sm:$0xff]
        %v867 = vld [vmem:[%s281 + $0x10] sm:$0xff]
        %v868 = vld [vmem:[%s281 + $0x18] sm:$0xff]
        %v869 = vld [vmem:[%s281 + $0x20] sm:$0xff]
        %v870 = vld [vmem:[%s281 + $0x28] sm:$0xff]
        %v871 = vld [vmem:[%s281 + $0x30] sm:$0xff]
        %v872 = vld [vmem:[%s281 + $0x38] sm:$0xff]
        %v873 = vld [vmem:[%s281 + $0x40] sm:$0xff]
        %v874 = vld [vmem:[%s281 + $0x48] sm:$0xff]
        %v875 = vld [vmem:[%s281 + $0x50] sm:$0xff]
        %v876 = vld [vmem:[%s281 + $0x58] sm:$0xff]
        %v877 = vld [vmem:[%s281 + $0x60] sm:$0xff]
        %v878 = vld [vmem:[%s281 + $0x68] sm:$0xff]
        %v879 = vld [vmem:[%s281 + $0x70] sm:$0xff]
        %v880 = vld [vmem:[%s281 + $0x78] sm:$0xff]
        %v881 = vld [vmem:[%s281 + $0x80] sm:$0xff]
        %v882 = vld [vmem:[%s281 + $0x88] sm:$0xff]
        %v883 = vld [vmem:[%s281 + $0x90] sm:$0xff]
        %v884 = vld [vmem:[%s281 + $0x98] sm:$0xff]
        %v885 = vld [vmem:[%s281 + $0xa0] sm:$0xff]
        %v886 = vld [vmem:[%s281 + $0xa8] sm:$0xff]
        %v887 = vld [vmem:[%s281 + $0xb0] sm:$0xff]
        %v888 = vld [vmem:[%s281 + $0xb8] sm:$0xff]
        %v889 = vld [vmem:[%s281 + $0xc0] sm:$0xff]
        %v890 = vld [vmem:[%s281 + $0xc8] sm:$0xff]
        %v891 = vld [vmem:[%s281 + $0xd0] sm:$0xff]
        %v892 = vld [vmem:[%s281 + $0xd8] sm:$0xff]
        %v893 = vld [vmem:[%s281 + $0xe0] sm:$0xff]
        %v894 = vld [vmem:[%s281 + $0xe8] sm:$0xff]
        %v895 = vld [vmem:[%s281 + $0xf0] sm:$0xff]
        %v896 = vld [vmem:[%s281 + $0xf8] sm:$0xff]
        %v897 = vld [vmem:[%s281 + $0x100] sm:$0xff]
        %v898 = vld [vmem:[%s281 + $0x108] sm:$0xff]
        %v899 = vld [vmem:[%s281 + $0x110] sm:$0xff]
        %v900 = vld [vmem:[%s281 + $0x118] sm:$0xff]
        %v901 = vld [vmem:[%s281 + $0x120] sm:$0xff]
        %v902 = vld [vmem:[%s281 + $0x128] sm:$0xff]
        %v903 = vld [vmem:[%s281 + $0x130] sm:$0xff]
        %v904 = vld [vmem:[%s281 + $0x138] sm:$0xff]
        %v905 = vld [vmem:[%s281 + $0x140] sm:$0xff]
        %v906 = vld [vmem:[%s281 + $0x148] sm:$0xff]
        %v907 = vld [vmem:[%s281 + $0x150] sm:$0xff]
        %v908 = vld [vmem:[%s281 + $0x158] sm:$0xff]
        %v909 = vld [vmem:[%s281 + $0x160] sm:$0xff]
        %v910 = vld [vmem:[%s281 + $0x168] sm:$0xff]
        %v911 = vld [vmem:[%s281 + $0x170] sm:$0xff]
        %v912 = vld [vmem:[%s281 + $0x178] sm:$0xff]
        %v913 = vld [vmem:[%s281 + $0x180] sm:$0xff]
        %v914 = vld [vmem:[%s281 + $0x188] sm:$0xff]
        %v915 = vld [vmem:[%s281 + $0x190] sm:$0xff]
        %v916 = vld [vmem:[%s281 + $0x198] sm:$0xff]
        %v917 = vld [vmem:[%s281 + $0x1a0] sm:$0xff]
        %v918 = vld [vmem:[%s281 + $0x1a8] sm:$0xff]
        %v919 = vld [vmem:[%s281 + $0x1b0] sm:$0xff]
        %v920 = vld [vmem:[%s281 + $0x1b8] sm:$0xff]
        %v921 = vld [vmem:[%s281 + $0x1c0] sm:$0xff]
        %v922 = vld [vmem:[%s281 + $0x1c8] sm:$0xff]
        %v923 = vld [vmem:[%s281 + $0x1d0] sm:$0xff]
        %v924 = vld [vmem:[%s281 + $0x1d8] sm:$0xff]
        %v925 = vld [vmem:[%s281 + $0x1e0] sm:$0xff]
        %v926 = vld [vmem:[%s281 + $0x1e8] sm:$0xff]
        %v927 = vld [vmem:[%s281 + $0x1f0] sm:$0xff]
        %v928 = vld [vmem:[%s281 + $0x1f8] sm:$0xff]
        %929 = vmatprep.subr.mxu0 0.0
        %930 = vmatpush1.msra.mxu0 %v865
        %931 = vmatprep.subr.mxu0 0.0
        %932 = vmatpush1.msra.mxu0 %v866
        %933 = vmatprep.subr.mxu0 0.0
        %934 = vmatpush1.msra.mxu0 %v867
        %935 = vmatprep.subr.mxu0 0.0
        %936 = vmatpush1.msra.mxu0 %v868
        %937 = vmatprep.subr.mxu0 0.0
        %938 = vmatpush1.msra.mxu0 %v869
        %939 = vmatprep.subr.mxu0 0.0
        %940 = vmatpush1.msra.mxu0 %v870
        %941 = vmatprep.subr.mxu0 0.0
        %942 = vmatpush1.msra.mxu0 %v871
        %943 = vmatprep.subr.mxu0 0.0
        %944 = vmatpush1.msra.mxu0 %v872
        %945 = vmatprep.subr.mxu0 0.0
        %946 = vmatpush1.msra.mxu0 %v873
        %947 = vmatprep.subr.mxu0 0.0
        %948 = vmatpush1.msra.mxu0 %v874
        %949 = vmatprep.subr.mxu0 0.0
        %950 = vmatpush1.msra.mxu0 %v875
        %951 = vmatprep.subr.mxu0 0.0
        %952 = vmatpush1.msra.mxu0 %v876
        %953 = vmatprep.subr.mxu0 0.0
        %954 = vmatpush1.msra.mxu0 %v877
        %955 = vmatprep.subr.mxu0 0.0
        %956 = vmatpush1.msra.mxu0 %v878
        %957 = vmatprep.subr.mxu0 0.0
        %958 = vmatpush1.msra.mxu0 %v879
        %959 = vmatprep.subr.mxu0 0.0
        %960 = vmatpush1.msra.mxu0 %v880
        %961 = vmatprep.subr.mxu0 0.0
        %962 = vmatpush1.msra.mxu0 %v881
        %963 = vmatprep.subr.mxu0 0.0
        %964 = vmatpush1.msra.mxu0 %v882
        %965 = vmatprep.subr.mxu0 0.0
        %966 = vmatpush1.msra.mxu0 %v883
        %967 = vmatprep.subr.mxu0 0.0
        %968 = vmatpush1.msra.mxu0 %v884
        %969 = vmatprep.subr.mxu0 0.0
        %970 = vmatpush1.msra.mxu0 %v885
        %971 = vmatprep.subr.mxu0 0.0
        %972 = vmatpush1.msra.mxu0 %v886
        %973 = vmatprep.subr.mxu0 0.0
        %974 = vmatpush1.msra.mxu0 %v887
        %975 = vmatprep.subr.mxu0 0.0
        %976 = vmatpush1.msra.mxu0 %v888
        %977 = vmatprep.subr.mxu0 0.0
        %978 = vmatpush1.msra.mxu0 %v889
        %979 = vmatprep.subr.mxu0 0.0
        %980 = vmatpush1.msra.mxu0 %v890
        %981 = vmatprep.subr.mxu0 0.0
        %982 = vmatpush1.msra.mxu0 %v891
        %983 = vmatprep.subr.mxu0 0.0
        %984 = vmatpush1.msra.mxu0 %v892
        %985 = vmatprep.subr.mxu0 0.0
        %986 = vmatpush1.msra.mxu0 %v893
        %987 = vmatprep.subr.mxu0 0.0
        %988 = vmatpush1.msra.mxu0 %v894
        %989 = vmatprep.subr.mxu0 0.0
        %990 = vmatpush1.msra.mxu0 %v895
        %991 = vmatprep.subr.mxu0 0.0
        %992 = vmatpush1.msra.mxu0 %v896
        %993 = vmatprep.mubr.f32.mxu0 %v786
        %994 = vmatmul.mubr.f32.gmra.mrb[0].mxu0 %v785
        %v995 = vpop.f32.mrb[0].mxu0
        %v996 = vadd.f32 0.0, %v995
        %v997 = vpop.f32.mrb[0].mxu0
        %998 = vmatprep.mubr.f32.mxu0 %v790
        %999 = vmatmul.mubr.f32.gmra.mrb[0].mxu0 %v789
        %v1000 = vpop.f32.mrb[0].mxu0
        %v1001 = vadd.f32 0.0, %v1000
        %v1002 = vpop.f32.mrb[0].mxu0
        %1003 = vmatprep.mubr.f32.mxu0 %v794
        %1004 = vmatmul.mubr.f32.gmra.mrb[0].mxu0 %v793
        %v1005 = vpop.f32.mrb[0].mxu0
        %v1006 = vadd.f32 0.0, %v1005
        %v1007 = vpop.f32.mrb[0].mxu0
        %1008 = vmatprep.mubr.f32.mxu0 %v798
        %1009 = vmatmul.mubr.f32.gmra.mrb[0].mxu0 %v797
        %v1010 = vpop.f32.mrb[0].mxu0
        %v1011 = vadd.f32 0.0, %v1010
        %v1012 = vpop.f32.mrb[0].mxu0
        %1013 = vmatprep.mubr.f32.mxu0 %v802
        %1014 = vmatmul.mubr.f32.gmra.mrb[0].mxu0 %v801
        %v1015 = vpop.f32.mrb[0].mxu0
        %v1016 = vadd.f32 0.0, %v1015
        %v1017 = vpop.f32.mrb[0].mxu0
        %1018 = vmatprep.mubr.f32.mxu0 %v806
        %1019 = vmatmul.mubr.f32.gmra.mrb[0].mxu0 %v805
        %v1020 = vpop.f32.mrb[0].mxu0
        %v1021 = vadd.f32 0.0, %v1020
        %v1022 = vpop.f32.mrb[0].mxu0
        %1023 = vmatprep.mubr.f32.mxu0 %v810
        %1024 = vmatmul.mubr.f32.gmra.mrb[0].mxu0 %v809
        %v1025 = vpop.f32.mrb[0].mxu0
        %v1026 = vadd.f32 0.0, %v1025
        %v1027 = vpop.f32.mrb[0].mxu0
        %1028 = vmatprep.mubr.f32.mxu0 %v814
        %1029 = vmatmul.mubr.f32.gmra.mrb[0].mxu0 %v813
        %v1030 = vpop.f32.mrb[0].mxu0
        %v1031 = vadd.f32 0.0, %v1030
        %v1032 = vpop.f32.mrb[0].mxu0
        %1033 = vmatprep.mubr.f32.mxu0 %v818
        %1034 = vmatmul.mubr.f32.gmra.mrb[0].mxu0 %v817
        %v1035 = vpop.f32.mrb[0].mxu0
        %v1036 = vadd.f32 0.0, %v1035
        %v1037 = vpop.f32.mrb[0].mxu0
        %1038 = vmatprep.mubr.f32.mxu0 %v822
        %1039 = vmatmul.mubr.f32.gmra.mrb[0].mxu0 %v821
        %v1040 = vpop.f32.mrb[0].mxu0
        %v1041 = vadd.f32 0.0, %v1040
        %v1042 = vpop.f32.mrb[0].mxu0
        %1043 = vmatprep.mubr.f32.mxu0 %v826
        %1044 = vmatmul.mubr.f32.gmra.mrb[0].mxu0 %v825
        %v1045 = vpop.f32.mrb[0].mxu0
        %v1046 = vadd.f32 0.0, %v1045
        %v1047 = vpop.f32.mrb[0].mxu0
        %1048 = vmatprep.mubr.f32.mxu0 %v830
        %1049 = vmatmul.mubr.f32.gmra.mrb[0].mxu0 %v829
        %v1050 = vpop.f32.mrb[0].mxu0
        %v1051 = vadd.f32 0.0, %v1050
        %v1052 = vpop.f32.mrb[0].mxu0
        %1053 = vmatprep.mubr.f32.mxu0 %v834
        %1054 = vmatmul.mubr.f32.gmra.mrb[0].mxu0 %v833
        %v1055 = vpop.f32.mrb[0].mxu0
        %v1056 = vadd.f32 0.0, %v1055
        %v1057 = vpop.f32.mrb[0].mxu0
        %1058 = vmatprep.mubr.f32.mxu0 %v838
        %1059 = vmatmul.mubr.f32.gmra.mrb[0].mxu0 %v837
        %v1060 = vpop.f32.mrb[0].mxu0
        %v1061 = vadd.f32 0.0, %v1060
        %v1062 = vpop.f32.mrb[0].mxu0
        %1063 = vmatprep.mubr.f32.mxu0 %v842
        %1064 = vmatmul.mubr.f32.gmra.mrb[0].mxu0 %v841
        %v1065 = vpop.f32.mrb[0].mxu0
        %v1066 = vadd.f32 0.0, %v1065
        %v1067 = vpop.f32.mrb[0].mxu0
        %1068 = vmatprep.mubr.f32.mxu0 %v846
        %1069 = vmatmul.mubr.f32.gmra.mrb[0].mxu0 %v845
        %v1070 = vpop.f32.mrb[0].mxu0
        %v1071 = vadd.f32 0.0, %v1070
        %v1072 = vpop.f32.mrb[0].mxu0
        %1073 = vdwg.mxu0
        %1074 = vmatprep.subr.mxu0 0.0
        %1075 = vmatpush1.msra.mxu0 %v897
        %1076 = vmatprep.subr.mxu0 0.0
        %1077 = vmatpush1.msra.mxu0 %v898
        %1078 = vmatprep.subr.mxu0 0.0
        %1079 = vmatpush1.msra.mxu0 %v899
        %1080 = vmatprep.subr.mxu0 0.0
        %1081 = vmatpush1.msra.mxu0 %v900
        %1082 = vmatprep.subr.mxu0 0.0
        %1083 = vmatpush1.msra.mxu0 %v901
        %1084 = vmatprep.subr.mxu0 0.0
        %1085 = vmatpush1.msra.mxu0 %v902
        %1086 = vmatprep.subr.mxu0 0.0
        %1087 = vmatpush1.msra.mxu0 %v903
        %1088 = vmatprep.subr.mxu0 0.0
        %1089 = vmatpush1.msra.mxu0 %v904
        %1090 = vmatprep.subr.mxu0 0.0
        %1091 = vmatpush1.msra.mxu0 %v905
        %1092 = vmatprep.subr.mxu0 0.0
        %1093 = vmatpush1.msra.mxu0 %v906
        %1094 = vmatprep.subr.mxu0 0.0
        %1095 = vmatpush1.msra.mxu0 %v907
        %1096 = vmatprep.subr.mxu0 0.0
        %1097 = vmatpush1.msra.mxu0 %v908
        %1098 = vmatprep.subr.mxu0 0.0
        %1099 = vmatpush1.msra.mxu0 %v909
        %1100 = vmatprep.subr.mxu0 0.0
        %1101 = vmatpush1.msra.mxu0 %v910
        %1102 = vmatprep.subr.mxu0 0.0
        %1103 = vmatpush1.msra.mxu0 %v911
        %1104 = vmatprep.subr.mxu0 0.0
        %1105 = vmatpush1.msra.mxu0 %v912
        %1106 = vmatprep.subr.mxu0 0.0
        %1107 = vmatpush1.msra.mxu0 %v913
        %1108 = vmatprep.subr.mxu0 0.0
        %1109 = vmatpush1.msra.mxu0 %v914
        %1110 = vmatprep.subr.mxu0 0.0
        %1111 = vmatpush1.msra.mxu0 %v915
        %1112 = vmatprep.subr.mxu0 0.0
        %1113 = vmatpush1.msra.mxu0 %v916
        %1114 = vmatprep.subr.mxu0 0.0
        %1115 = vmatpush1.msra.mxu0 %v917
        %1116 = vmatprep.subr.mxu0 0.0
        %1117 = vmatpush1.msra.mxu0 %v918
        %1118 = vmatprep.subr.mxu0 0.0
        %1119 = vmatpush1.msra.mxu0 %v919
        %1120 = vmatprep.subr.mxu0 0.0
        %1121 = vmatpush1.msra.mxu0 %v920
        %1122 = vmatprep.subr.mxu0 0.0
        %1123 = vmatpush1.msra.mxu0 %v921
        %1124 = vmatprep.subr.mxu0 0.0
        %1125 = vmatpush1.msra.mxu0 %v922
        %1126 = vmatprep.subr.mxu0 0.0
        %1127 = vmatpush1.msra.mxu0 %v923
        %1128 = vmatprep.subr.mxu0 0.0
        %1129 = vmatpush1.msra.mxu0 %v924
        %1130 = vmatprep.subr.mxu0 0.0
        %1131 = vmatpush1.msra.mxu0 %v925
        %1132 = vmatprep.subr.mxu0 0.0
        %1133 = vmatpush1.msra.mxu0 %v926
        %1134 = vmatprep.subr.mxu0 0.0
        %1135 = vmatpush1.msra.mxu0 %v927
        %1136 = vmatprep.subr.mxu0 0.0
        %1137 = vmatpush1.msra.mxu0 %v928
        %1138 = vmatprep.mubr.f32.mxu0 %v788
        %1139 = vmatmul.mubr.f32.gmra.mrb[0].mxu0 %v787
        %v1140 = vpop.f32.mrb[0].mxu0
        %v1141 = vadd.f32 %v996, %v1140
        %v1142 = vpop.f32.mrb[0].mxu0
        %1143 = vmatprep.mubr.f32.mxu0 %v792
        %1144 = vmatmul.mubr.f32.gmra.mrb[0].mxu0 %v791
        %v1145 = vpop.f32.mrb[0].mxu0
        %v1146 = vadd.f32 %v1001, %v1145
        %v1147 = vpop.f32.mrb[0].mxu0
        %1148 = vmatprep.mubr.f32.mxu0 %v796
        %1149 = vmatmul.mubr.f32.gmra.mrb[0].mxu0 %v795
        %v1150 = vpop.f32.mrb[0].mxu0
        %v1151 = vadd.f32 %v1006, %v1150
        %v1152 = vpop.f32.mrb[0].mxu0
        %1153 = vmatprep.mubr.f32.mxu0 %v800
        %1154 = vmatmul.mubr.f32.gmra.mrb[0].mxu0 %v799
        %v1155 = vpop.f32.mrb[0].mxu0
        %v1156 = vadd.f32 %v1011, %v1155
        %v1157 = vpop.f32.mrb[0].mxu0
        %1158 = vmatprep.mubr.f32.mxu0 %v804
        %1159 = vmatmul.mubr.f32.gmra.mrb[0].mxu0 %v803
        %v1160 = vpop.f32.mrb[0].mxu0
        %v1161 = vadd.f32 %v1016, %v1160
        %v1162 = vpop.f32.mrb[0].mxu0
        %1163 = vmatprep.mubr.f32.mxu0 %v808
        %1164 = vmatmul.mubr.f32.gmra.mrb[0].mxu0 %v807
        %v1165 = vpop.f32.mrb[0].mxu0
        %v1166 = vadd.f32 %v1021, %v1165
        %v1167 = vpop.f32.mrb[0].mxu0
        %1168 = vmatprep.mubr.f32.mxu0 %v812
        %1169 = vmatmul.mubr.f32.gmra.mrb[0].mxu0 %v811
        %v1170 = vpop.f32.mrb[0].mxu0
        %v1171 = vadd.f32 %v1026, %v1170
        %v1172 = vpop.f32.mrb[0].mxu0
        %1173 = vmatprep.mubr.f32.mxu0 %v816
        %1174 = vmatmul.mubr.f32.gmra.mrb[0].mxu0 %v815
        %v1175 = vpop.f32.mrb[0].mxu0
        %v1176 = vadd.f32 %v1031, %v1175
        %v1177 = vpop.f32.mrb[0].mxu0
        %1178 = vmatprep.mubr.f32.mxu0 %v820
        %1179 = vmatmul.mubr.f32.gmra.mrb[0].mxu0 %v819
        %v1180 = vpop.f32.mrb[0].mxu0
        %v1181 = vadd.f32 %v1036, %v1180
        %v1182 = vpop.f32.mrb[0].mxu0
        %1183 = vmatprep.mubr.f32.mxu0 %v824
        %1184 = vmatmul.mubr.f32.gmra.mrb[0].mxu0 %v823
        %v1185 = vpop.f32.mrb[0].mxu0
        %v1186 = vadd.f32 %v1041, %v1185
        %v1187 = vpop.f32.mrb[0].mxu0
        %1188 = vmatprep.mubr.f32.mxu0 %v828
        %1189 = vmatmul.mubr.f32.gmra.mrb[0].mxu0 %v827
        %v1190 = vpop.f32.mrb[0].mxu0
        %v1191 = vadd.f32 %v1046, %v1190
        %v1192 = vpop.f32.mrb[0].mxu0
        %1193 = vmatprep.mubr.f32.mxu0 %v832
        %1194 = vmatmul.mubr.f32.gmra.mrb[0].mxu0 %v831
        %v1195 = vpop.f32.mrb[0].mxu0
        %v1196 = vadd.f32 %v1051, %v1195
        %v1197 = vpop.f32.mrb[0].mxu0
        %1198 = vmatprep.mubr.f32.mxu0 %v836
        %1199 = vmatmul.mubr.f32.gmra.mrb[0].mxu0 %v835
        %v1200 = vpop.f32.mrb[0].mxu0
        %v1201 = vadd.f32 %v1056, %v1200
        %v1202 = vpop.f32.mrb[0].mxu0
        %1203 = vmatprep.mubr.f32.mxu0 %v840
        %1204 = vmatmul.mubr.f32.gmra.mrb[0].mxu0 %v839
        %v1205 = vpop.f32.mrb[0].mxu0
        %v1206 = vadd.f32 %v1061, %v1205
        %v1207 = vpop.f32.mrb[0].mxu0
        %1208 = vmatprep.mubr.f32.mxu0 %v844
        %1209 = vmatmul.mubr.f32.gmra.mrb[0].mxu0 %v843
        %v1210 = vpop.f32.mrb[0].mxu0
        %v1211 = vadd.f32 %v1066, %v1210
        %v1212 = vpop.f32.mrb[0].mxu0
        %1213 = vmatprep.mubr.f32.mxu0 %v848
        %1214 = vmatmul.mubr.f32.gmra.mrb[0].mxu0 %v847
        %v1215 = vpop.f32.mrb[0].mxu0
        %v1216 = vadd.f32 %v1071, %v1215
        %v1217 = vpop.f32.mrb[0].mxu0
        %1218 = vdwg.mxu0
        %v1219 = vadd.f32 %v849, %v1141
        %v1220 = vadd.f32 %v850, %v1146
        %v1221 = vadd.f32 %v851, %v1151
        %v1222 = vadd.f32 %v852, %v1156
        %v1223 = vadd.f32 %v853, %v1161
        %v1224 = vadd.f32 %v854, %v1166
        %v1225 = vadd.f32 %v855, %v1171
        %v1226 = vadd.f32 %v856, %v1176
        %v1227 = vadd.f32 %v857, %v1181
        %v1228 = vadd.f32 %v858, %v1186
        %v1229 = vadd.f32 %v859, %v1191
        %v1230 = vadd.f32 %v860, %v1196
        %v1231 = vadd.f32 %v861, %v1201
        %v1232 = vadd.f32 %v862, %v1206
        %v1233 = vadd.f32 %v863, %v1211
        %v1234 = vadd.f32 %v864, %v1216
        %1235 = vst [vmem:[#allocation2] sm:$0xff] %v1219
        %1236 = vst [vmem:[#allocation2 + $0x8] sm:$0xff] %v1220
        %1237 = vst [vmem:[#allocation2 + $0x10] sm:$0xff] %v1221
        %1238 = vst [vmem:[#allocation2 + $0x18] sm:$0xff] %v1222
        %1239 = vst [vmem:[#allocation2 + $0x20] sm:$0xff] %v1223
        %1240 = vst [vmem:[#allocation2 + $0x28] sm:$0xff] %v1224
        %1241 = vst [vmem:[#allocation2 + $0x30] sm:$0xff] %v1225
        %1242 = vst [vmem:[#allocation2 + $0x38] sm:$0xff] %v1226
        %1243 = vst [vmem:[#allocation2 + $0x40] sm:$0xff] %v1227
        %1244 = vst [vmem:[#allocation2 + $0x48] sm:$0xff] %v1228
        %1245 = vst [vmem:[#allocation2 + $0x50] sm:$0xff] %v1229
        %1246 = vst [vmem:[#allocation2 + $0x58] sm:$0xff] %v1230
        %1247 = vst [vmem:[#allocation2 + $0x60] sm:$0xff] %v1231
        %1248 = vst [vmem:[#allocation2 + $0x68] sm:$0xff] %v1232
        %1249 = vst [vmem:[#allocation2 + $0x70] sm:$0xff] %v1233
        %1250 = vst [vmem:[#allocation2 + $0x78] sm:$0xff] %v1234
        %p1251 = scmp.eq.s32.totalorder %s27, 1
        // Predicated region
        $region53: #{positionwise_feed_forward.1} parent=39 // pred_check
          %p1252 = pneg %p1251
        $region54: #{positionwise_feed_forward.1} parent=39 // pred_check_branch
          %1254 = sbr.rel (%p1252) target = $region56
        $region55: #{positionwise_feed_forward.1} parent=39 // pred_region
          %v1255 = vld [vmem:[#allocation2] sm:$0xff]
          %v1256 = vld [vmem:[#allocation2 + $0x8] sm:$0xff]
          %v1257 = vld [vmem:[#allocation2 + $0x10] sm:$0xff]
          %v1258 = vld [vmem:[#allocation2 + $0x18] sm:$0xff]
          %v1259 = vld [vmem:[#allocation2 + $0x20] sm:$0xff]
          %v1260 = vld [vmem:[#allocation2 + $0x28] sm:$0xff]
          %v1261 = vld [vmem:[#allocation2 + $0x30] sm:$0xff]
          %v1262 = vld [vmem:[#allocation2 + $0x38] sm:$0xff]
          %v1263 = vld [vmem:[#allocation2 + $0x40] sm:$0xff]
          %v1264 = vld [vmem:[#allocation2 + $0x48] sm:$0xff]
          %v1265 = vld [vmem:[#allocation2 + $0x50] sm:$0xff]
          %v1266 = vld [vmem:[#allocation2 + $0x58] sm:$0xff]
          %v1267 = vld [vmem:[#allocation2 + $0x60] sm:$0xff]
          %v1268 = vld [vmem:[#allocation2 + $0x68] sm:$0xff]
          %v1269 = vld [vmem:[#allocation2 + $0x70] sm:$0xff]
          %v1270 = vld [vmem:[#allocation2 + $0x78] sm:$0xff]
          %v1271 = vld [vmem:[%s4] sm:$0x1]
          %v1273 = vlaneseq
          %v1274 = vshrl.u32 %v1273, 7
          %v1275 = vsub.s32 0, %v1274
          %v1276 = vrot.slane %v1271, %v1275
          %v1278 = vadd.f32 %v1255, %v1276
          %v1279 = vadd.f32 %v1256, %v1276
          %v1280 = vadd.f32 %v1257, %v1276
          %v1281 = vadd.f32 %v1258, %v1276
          %v1282 = vadd.f32 %v1259, %v1276
          %v1283 = vadd.f32 %v1260, %v1276
          %v1284 = vadd.f32 %v1261, %v1276
          %v1285 = vadd.f32 %v1262, %v1276
          %v1286 = vadd.f32 %v1263, %v1276
          %v1287 = vadd.f32 %v1264, %v1276
          %v1288 = vadd.f32 %v1265, %v1276
          %v1289 = vadd.f32 %v1266, %v1276
          %v1290 = vadd.f32 %v1267, %v1276
          %v1291 = vadd.f32 %v1268, %v1276
          %v1292 = vadd.f32 %v1269, %v1276
          %v1293 = vadd.f32 %v1270, %v1276
          %1294 = vst [vmem:[%s339] sm:$0xff] %v1278
          %1295 = vst [vmem:[%s339 + $0x8] sm:$0xff] %v1279
          %1296 = vst [vmem:[%s339 + $0x10] sm:$0xff] %v1280
          %1297 = vst [vmem:[%s339 + $0x18] sm:$0xff] %v1281
          %1298 = vst [vmem:[%s339 + $0x20] sm:$0xff] %v1282
          %1299 = vst [vmem:[%s339 + $0x28] sm:$0xff] %v1283
          %1300 = vst [vmem:[%s339 + $0x30] sm:$0xff] %v1284
          %1301 = vst [vmem:[%s339 + $0x38] sm:$0xff] %v1285
          %1302 = vst [vmem:[%s339 + $0x40] sm:$0xff] %v1286
          %1303 = vst [vmem:[%s339 + $0x48] sm:$0xff] %v1287
          %1304 = vst [vmem:[%s339 + $0x50] sm:$0xff] %v1288
          %1305 = vst [vmem:[%s339 + $0x58] sm:$0xff] %v1289
          %1306 = vst [vmem:[%s339 + $0x60] sm:$0xff] %v1290
          %1307 = vst [vmem:[%s339 + $0x68] sm:$0xff] %v1291
          %1308 = vst [vmem:[%s339 + $0x70] sm:$0xff] %v1292
          %1309 = vst [vmem:[%s339 + $0x78] sm:$0xff] %v1293
        $region56: #{positionwise_feed_forward.1} parent=39 // pred_fallthru
          _
        %s1310 = smul.u32 16, %s26
        %p1311 = scmp.lt.s32.totalorder %s1310, 47
        %s1312 = scalar_select %p1311, %s1310, 47
        %s1313 = smul.addr %s1312, 8
        %s1314 = scalar_lea.vmem %s5, %s1313
        // Predicated region
        $region57: #{positionwise_feed_forward.1} parent=39 // pred_check
          %p1315 = pneg %p177
        $region58: #{positionwise_feed_forward.1} parent=39 // pred_check_branch
          %1317 = sbr.rel (%p1315) target = $region60
        $region59: #{positionwise_feed_forward.1} parent=39 // pred_region
          %s1318 = smul.u32 16, %s26
        $region60: #{positionwise_feed_forward.1} parent=39 // pred_fallthru
          _
      $region40: #{positionwise_feed_forward.1} parent=5 // pred_fallthru
        _
      %p1319 = scmp.le.s32.totalorder 2, %s17
      // Predicated region
      $region61: #{positionwise_feed_forward.1} parent=5 // pred_check
        %p1320 = pneg %p1319
      $region62: #{positionwise_feed_forward.1} parent=5 // pred_check_branch
        %1322 = sbr.rel (%p1320) target = $region64
      $region63: #{positionwise_feed_forward.1} parent=5 // pred_region
        %s1323 = ssub.s32 %s17, 2
        // Predicated region
        $region65: #{positionwise_feed_forward.1} parent=63 // pred_check
          %p1324 = pneg %p183
        $region66: #{positionwise_feed_forward.1} parent=63 // pred_check_branch
          %1326 = sbr.rel (%p1324) target = $region68
        $region67: #{positionwise_feed_forward.1} parent=63 // pred_region
          %s1327 = smul.u32 16, %s28
          %p1328 = scmp.lt.s32.totalorder %s1327, 47
          %s1329 = scalar_select %p1328, %s1327, 47
          %s1330 = smul.addr %s1329, 8
          %s1331 = scalar_lea.vmem %s5, %s1330
        $region68: #{positionwise_feed_forward.1} parent=63 // pred_fallthru
          _
      $region64: #{positionwise_feed_forward.1} parent=5 // pred_fallthru
        _
    $region6: #{positionwise_feed_forward.1} parent=1 // loop_footer
      %s21 = sadd.s32 1, %s17
    $region7: #{positionwise_feed_forward.1} parent=1 // loop_footer_branch
      %16 = sbr.rel target = $region3
    $region8: #{positionwise_feed_forward.1} parent=1 // loop_exit
      _
    %1332 = vsyncpa [#allocation4], 1
    %s1333 = scalar_lea.sflag [#allocation4], 1
    %1334 = vsyncpa %s1333, 1
    %1335 = vsyncpa [#allocation6], 1
    %s1336 = scalar_lea.sflag [#allocation6], 1
    %1337 = vsyncpa %s1336, 1

</llo_original>
